<compile_context>
chip_gen: v7x
topology: tpu7x:2x2x1
jax: 0.10.0
libtpu: 0.0.40
codegen_flags: <defaults>
</compile_context>

<pallas_src>
import functools

import jax
import jax.numpy as jnp
import numpy as np
from jax.experimental import pallas as pl
from jax.experimental.pallas import tpu as pltpu

_LANES = 128
_SUBL = 16  # sublane multiple that is safe for both f32 (8) and bf16 (16) tiles


def _cdiv(a: int, b: int) -> int:
    return -(-a // b)


def _round_up(a: int, b: int) -> int:
    return _cdiv(a, b) * b


def _posenc_kernel(x_ref, o_ref, *, freqs):
    """Lane-dense positional-encoding hot path.

    x_ref: (tile_rows, 128) VMEM tile of raw input elements.
    o_ref: (1 + 2*len(freqs), tile_rows, 128) band-major VMEM output tile.
    """
    x = x_ref[...].astype(jnp.float32)
    o_ref[0, :, :] = x.astype(o_ref.dtype)
    # Static (unrolled) loop over the small number of frequency bands; each
    # band is written straight to its slice of the output (no concatenate).
    for k, f in enumerate(freqs):
        xf = x * f
        o_ref[1 + 2 * k, :, :] = jnp.sin(xf).astype(o_ref.dtype)
        o_ref[2 + 2 * k, :, :] = jnp.cos(xf).astype(o_ref.dtype)


def positional_encoder(x, n_freqs: int, log_space: bool = False,
                       tile_rows: int = 512, out_dtype=None):
    """JAX/Pallas equivalent of PositionalEncoder.forward."""
    d_input = x.shape[-1]
    n_bands = 1 + 2 * n_freqs
    d_output = d_input * n_bands
    out_dtype = jnp.dtype(x.dtype if out_dtype is None else out_dtype)

    # freq_bands, same as the PyTorch buffer (deterministic, no checkpoint).
    if log_space:
        freqs = 2.0 ** np.linspace(0.0, n_freqs - 1, n_freqs)
    else:
        freqs = np.linspace(2.0 ** 0.0, 2.0 ** (n_freqs - 1), n_freqs)
    freqs = tuple(float(f) for f in freqs)
    # NOTE: for log_space power-of-two bands a double-angle recurrence could
    # replace most sin/cos polynomial evaluations (v5e VALU win), but it is
    # skipped here to keep bit-level parity with the reference.

    batch_shape = x.shape[:-1]
    n_rows = int(np.prod(batch_shape)) if batch_shape else 1
    m = n_rows * d_input  # total number of scalar elements

    # Lane-dense element layout: pad element count to a whole number of
    # (tile_rows, 128) tiles — no divisibility requirement on the caller.
    rows = max(1, _cdiv(m, _LANES))
    tile_rows = max(_SUBL, min(int(tile_rows), _round_up(rows, _SUBL)))
    tile_rows = _round_up(tile_rows, _SUBL)
    rows_padded = _round_up(rows, tile_rows)
    n_el = rows_padded * _LANES

    x_flat = x.reshape(-1)
    if n_el != m:
        x_flat = jnp.pad(x_flat, (0, n_el - m))
    x2 = x_flat.reshape(rows_padded, _LANES)

    grid = (rows_padded // tile_rows,)

    cost = pl.CostEstimate(
        flops=int(n_el * (2 * n_freqs + 1)),
        transcendentals=int(n_el * 2 * n_freqs),
        bytes_accessed=int(n_el * x.dtype.itemsize
                           + n_el * n_bands * out_dtype.itemsize),
    )

    out = pl.pallas_call(
        functools.partial(_posenc_kernel, freqs=freqs),
        out_shape=jax.ShapeDtypeStruct((n_bands, rows_padded, _LANES), out_dtype),
        grid=grid,
        in_specs=[pl.BlockSpec((tile_rows, _LANES), lambda i: (i, 0))],
        out_specs=pl.BlockSpec((n_bands, tile_rows, _LANES), lambda i: (0, i, 0)),
        compiler_params=pltpu.CompilerParams(
            dimension_semantics=("parallel",)),  # shards across v7x's 2 TCs
        cost_estimate=cost,
    )(x2)

    # Recover the PyTorch column interleave [x, sin f0, cos f0, sin f1, ...].
    # (Ideally fold this fixed permutation into the consumer's first weight
    # matrix so no transpose is materialized at all.)
    out = out.reshape(n_bands, n_el)[:, :m]            # drop padding tail
    out = out.reshape(n_bands, n_rows, d_input)        # (bands, N, d)
    out = jnp.transpose(out, (1, 0, 2))                # (N, bands, d)
    return out.reshape(*batch_shape, d_output)


def _reference(x, n_freqs: int, log_space: bool = False):
    """Pure-JAX reference reproducing the PyTorch forward exactly."""
    if log_space:
        freqs = 2.0 ** jnp.linspace(0.0, n_freqs - 1, n_freqs)
    else:
        freqs = jnp.linspace(2.0 ** 0.0, 2.0 ** (n_freqs - 1), n_freqs)
    xtf = x[..., None] * freqs                                    # (..., d, F)
    fn_x = jnp.stack([jnp.sin(xtf), jnp.cos(xtf)], axis=-1)       # (..., d, F, 2)
    fn_x = fn_x.reshape(*xtf.shape[:-1], -1)                      # (..., d, 2F)
    fn_x = jnp.swapaxes(fn_x, -1, -2).reshape(*x.shape[:-1], -1)  # (..., 2F*d)
    return jnp.concatenate([x, fn_x], axis=-1)


if __name__ == "__main__":
    d_input = 3      # e.g. xyz points
    n_freqs = 4

    key = jax.random.PRNGKey(0)

    # Test 1: small shape, f32 output, single grid step.
    x = jax.random.normal(key, (2, 64, d_input), dtype=jnp.float32)
    out = jax.block_until_ready(positional_encoder(x, n_freqs, log_space=False))
    ref = _reference(x, n_freqs, log_space=False)
    assert out.shape == (2, 64, d_input * (1 + 2 * n_freqs)), out.shape
    np.testing.assert_allclose(np.asarray(out), np.asarray(ref),
                               atol=1e-5, rtol=1e-4)

    # Test 2: non-divisible element count, multi-step grid (padding tail),
    #         log-spaced frequency bands.
    x2 = jax.random.normal(jax.random.PRNGKey(1), (4, 250, d_input),
                           dtype=jnp.float32)
    out2 = jax.block_until_ready(
        positional_encoder(x2, n_freqs, log_space=True, tile_rows=16))
    ref2 = _reference(x2, n_freqs, log_space=True)
    assert out2.shape == (4, 250, d_input * (1 + 2 * n_freqs)), out2.shape
    np.testing.assert_allclose(np.asarray(out2), np.asarray(ref2),
                               atol=1e-4, rtol=1e-4)

    # Test 3: bf16 output (halves dominant HBM writeback); f32 compute inside.
    out3 = jax.block_until_ready(
        positional_encoder(x, n_freqs, out_dtype=jnp.bfloat16))
    np.testing.assert_allclose(np.asarray(out3.astype(jnp.float32)),
                               np.asarray(ref), atol=2e-2, rtol=2e-2)

    print("KERNEL_OK")
</pallas_src>

<mosaic_0001>
module attributes {stable_mosaic.version = 11 : i64} {
  func.func @_posenc_kernel(%arg0: i32, %arg1: memref<16x128xf32, #tpu.memory_space<vmem>>, %arg2: memref<9x16x128xf32, #tpu.memory_space<vmem>>) attributes {dimension_semantics = [#tpu.dimension_semantics<parallel>], iteration_bounds = array<i64: 1>, scalar_prefetch = 0 : i64, scratch_operands = 0 : i64, tpu.core_type = #tpu.core_type<tc>, window_params = [{transform_indices = @transform_0, window_bounds = array<i64: 16, 128>}, {transform_indices = @transform_1, window_bounds = array<i64: 9, 16, 128>}]} {
    %c0 = arith.constant 0 : index
    %c0_0 = arith.constant 0 : index
    %0 = vector.load %arg1[%c0, %c0_0] : memref<16x128xf32, #tpu.memory_space<vmem>>, vector<16x128xf32>
    %c0_1 = arith.constant 0 : index
    %c0_2 = arith.constant 0 : index
    %c0_3 = arith.constant 0 : index
    %1 = vector.load %arg2[%c0_1, %c0_2, %c0_3] : memref<9x16x128xf32, #tpu.memory_space<vmem>>, vector<1x16x128xf32>
    %2 = vector.shape_cast %1 : vector<1x16x128xf32> to vector<16x128xf32>
    %3 = vector.shape_cast %0 : vector<16x128xf32> to vector<1x16x128xf32>
    tpu.vector_store %arg2[%c0_1, %c0_2, %c0_3], %3 {strides = array<i32>} : memref<9x16x128xf32, #tpu.memory_space<vmem>>, vector<1x16x128xf32>,
    %cst = arith.constant 1.000000e+00 : f32
    %4 = vector.broadcast %cst : f32 to vector<16x128xf32>
    %5 = arith.mulf %0, %4 : vector<16x128xf32>
    %6 = math.sin %5 : vector<16x128xf32>
    %c1 = arith.constant 1 : index
    %c0_4 = arith.constant 0 : index
    %c0_5 = arith.constant 0 : index
    %7 = vector.load %arg2[%c1, %c0_4, %c0_5] : memref<9x16x128xf32, #tpu.memory_space<vmem>>, vector<1x16x128xf32>
    %8 = vector.shape_cast %7 : vector<1x16x128xf32> to vector<16x128xf32>
    %9 = vector.shape_cast %6 : vector<16x128xf32> to vector<1x16x128xf32>
    tpu.vector_store %arg2[%c1, %c0_4, %c0_5], %9 {strides = array<i32>} : memref<9x16x128xf32, #tpu.memory_space<vmem>>, vector<1x16x128xf32>,
    %10 = math.cos %5 : vector<16x128xf32>
    %c2 = arith.constant 2 : index
    %c0_6 = arith.constant 0 : index
    %c0_7 = arith.constant 0 : index
    %11 = vector.load %arg2[%c2, %c0_6, %c0_7] : memref<9x16x128xf32, #tpu.memory_space<vmem>>, vector<1x16x128xf32>
    %12 = vector.shape_cast %11 : vector<1x16x128xf32> to vector<16x128xf32>
    %13 = vector.shape_cast %10 : vector<16x128xf32> to vector<1x16x128xf32>
    tpu.vector_store %arg2[%c2, %c0_6, %c0_7], %13 {strides = array<i32>} : memref<9x16x128xf32, #tpu.memory_space<vmem>>, vector<1x16x128xf32>,
    %cst_8 = arith.constant 3.33333325 : f32
    %14 = vector.broadcast %cst_8 : f32 to vector<16x128xf32>
    %15 = arith.mulf %0, %14 : vector<16x128xf32>
    %16 = math.sin %15 : vector<16x128xf32>
    %c3 = arith.constant 3 : index
    %c0_9 = arith.constant 0 : index
    %c0_10 = arith.constant 0 : index
    %17 = vector.load %arg2[%c3, %c0_9, %c0_10] : memref<9x16x128xf32, #tpu.memory_space<vmem>>, vector<1x16x128xf32>
    %18 = vector.shape_cast %17 : vector<1x16x128xf32> to vector<16x128xf32>
    %19 = vector.shape_cast %16 : vector<16x128xf32> to vector<1x16x128xf32>
    tpu.vector_store %arg2[%c3, %c0_9, %c0_10], %19 {strides = array<i32>} : memref<9x16x128xf32, #tpu.memory_space<vmem>>, vector<1x16x128xf32>,
    %20 = math.cos %15 : vector<16x128xf32>
    %c4 = arith.constant 4 : index
    %c0_11 = arith.constant 0 : index
    %c0_12 = arith.constant 0 : index
    %21 = vector.load %arg2[%c4, %c0_11, %c0_12] : memref<9x16x128xf32, #tpu.memory_space<vmem>>, vector<1x16x128xf32>
    %22 = vector.shape_cast %21 : vector<1x16x128xf32> to vector<16x128xf32>
    %23 = vector.shape_cast %20 : vector<16x128xf32> to vector<1x16x128xf32>
    tpu.vector_store %arg2[%c4, %c0_11, %c0_12], %23 {strides = array<i32>} : memref<9x16x128xf32, #tpu.memory_space<vmem>>, vector<1x16x128xf32>,
    %cst_13 = arith.constant 5.66666651 : f32
    %24 = vector.broadcast %cst_13 : f32 to vector<16x128xf32>
    %25 = arith.mulf %0, %24 : vector<16x128xf32>
    %26 = math.sin %25 : vector<16x128xf32>
    %c5 = arith.constant 5 : index
    %c0_14 = arith.constant 0 : index
    %c0_15 = arith.constant 0 : index
    %27 = vector.load %arg2[%c5, %c0_14, %c0_15] : memref<9x16x128xf32, #tpu.memory_space<vmem>>, vector<1x16x128xf32>
    %28 = vector.shape_cast %27 : vector<1x16x128xf32> to vector<16x128xf32>
    %29 = vector.shape_cast %26 : vector<16x128xf32> to vector<1x16x128xf32>
    tpu.vector_store %arg2[%c5, %c0_14, %c0_15], %29 {strides = array<i32>} : memref<9x16x128xf32, #tpu.memory_space<vmem>>, vector<1x16x128xf32>,
    %30 = math.cos %25 : vector<16x128xf32>
    %c6 = arith.constant 6 : index
    %c0_16 = arith.constant 0 : index
    %c0_17 = arith.constant 0 : index
    %31 = vector.load %arg2[%c6, %c0_16, %c0_17] : memref<9x16x128xf32, #tpu.memory_space<vmem>>, vector<1x16x128xf32>
    %32 = vector.shape_cast %31 : vector<1x16x128xf32> to vector<16x128xf32>
    %33 = vector.shape_cast %30 : vector<16x128xf32> to vector<1x16x128xf32>
    tpu.vector_store %arg2[%c6, %c0_16, %c0_17], %33 {strides = array<i32>} : memref<9x16x128xf32, #tpu.memory_space<vmem>>, vector<1x16x128xf32>,
    %cst_18 = arith.constant 8.000000e+00 : f32
    %34 = vector.broadcast %cst_18 : f32 to vector<16x128xf32>
    %35 = arith.mulf %0, %34 : vector<16x128xf32>
    %36 = math.sin %35 : vector<16x128xf32>
    %c7 = arith.constant 7 : index
    %c0_19 = arith.constant 0 : index
    %c0_20 = arith.constant 0 : index
    %37 = vector.load %arg2[%c7, %c0_19, %c0_20] : memref<9x16x128xf32, #tpu.memory_space<vmem>>, vector<1x16x128xf32>
    %38 = vector.shape_cast %37 : vector<1x16x128xf32> to vector<16x128xf32>
    %39 = vector.shape_cast %36 : vector<16x128xf32> to vector<1x16x128xf32>
    tpu.vector_store %arg2[%c7, %c0_19, %c0_20], %39 {strides = array<i32>} : memref<9x16x128xf32, #tpu.memory_space<vmem>>, vector<1x16x128xf32>,
    %40 = math.cos %35 : vector<16x128xf32>
    %c8 = arith.constant 8 : index
    %c0_21 = arith.constant 0 : index
    %c0_22 = arith.constant 0 : index
    %41 = vector.load %arg2[%c8, %c0_21, %c0_22] : memref<9x16x128xf32, #tpu.memory_space<vmem>>, vector<1x16x128xf32>
    %42 = vector.shape_cast %41 : vector<1x16x128xf32> to vector<16x128xf32>
    %43 = vector.shape_cast %40 : vector<16x128xf32> to vector<1x16x128xf32>
    tpu.vector_store %arg2[%c8, %c0_21, %c0_22], %43 {strides = array<i32>} : memref<9x16x128xf32, #tpu.memory_space<vmem>>, vector<1x16x128xf32>,
    return
  }
  func.func @transform_0(%arg0: i32) -> (i32, i32) {
    %c0_i32 = arith.constant 0 : i32
    %c0_i32_0 = arith.constant 0 : i32
    return %arg0, %c0_i32 : i32, i32
  }
  func.func @transform_1(%arg0: i32) -> (i32, i32, i32) {
    %c0_i32 = arith.constant 0 : i32
    %c0_i32_0 = arith.constant 0 : i32
    %c0_i32_1 = arith.constant 0 : i32
    return %c0_i32, %arg0, %c0_i32_0 : i32, i32, i32
  }
}

</mosaic_0001>

<llo_original>
// kernel: tpu_custom_call.1
$region0: #{tpu_custom_call.1}
  #allocation0 [shape = 'u32[]', space=smem, size = 0x4, offset = 0x4, fixed_abs, tag = 'smem constant byte address 0x4 - core index']
  #allocation1 [shape = 'u32[144,128]{1,0:T(1,128)}', space=vmem, size = 0x12000, scoped, tag = 'internal scratch']
  %s0 = inlined_call_operand.hbm [shape: f32[16,128], index: 0, kind: input, shape index: {}]
  %s1 = inlined_call_operand.hbm [shape: f32[9,16,128], index: 1, kind: output, shape index: {}]
  %s2 = sld [smem:[#allocation0]]
  $region18: #{tpu_custom_call.1} parent=0
    _
  %s4 = ssub.s32 1, %s2
  %s5 = scalar_select 0, %s4, %s2
  $region1: #{tpu_custom_call.1} parent=0
    #allocation2 [shape = 'u8[8192]{0}', space=vmem, size = 0x2000, scoped, tag = 'input window, operand 0, single buffered']
    #allocation3 [shape = 's32[1]{0}', space=sflag, size = 0x4, scoped, tag = 'scoped memory for tpu_custom_call.1']
    #allocation4 [shape = 's32[1]{0}', space=sflag, size = 0x4, scoped, tag = 'scoped memory for tpu_custom_call.1']
    #allocation5 [shape = 'u8[73728]{0}', space=vmem, size = 0x12000, scoped, tag = 'output window, operand 0, single buffered']
    %6 = vsyncpa [#allocation3], 0
    %7 = vsyncpa [#allocation4], 0
    // Predicated region
    $region2: #{tpu_custom_call.1} parent=1 // pred_check
      _
    $region3: #{tpu_custom_call.1} parent=1 // pred_check_branch
      %9 = sbr.rel (0) target = $region5
    $region4: #{tpu_custom_call.1} parent=1 // pred_region
      %s11 = ssub.s32 256, 256
      %12 = vsyncadd [#allocation3], %s11
      %s13 = sshll.u32 [#allocation2], 4
      %s14 = int_to_ptr.vmem [resolvable:$true] %s13
      %19 = dma.hbm_to_vmem [thread:$0]  %s0, 256, %s14, [#allocation3], 128, 128, 8
    $region5: #{tpu_custom_call.1} parent=1 // pred_fallthru
      _
    // Predicated region
    $region6: #{tpu_custom_call.1} parent=1 // pred_check
      _
    $region7: #{tpu_custom_call.1} parent=1 // pred_check_branch
      %21 = sbr.rel (0) target = $region9
    $region8: #{tpu_custom_call.1} parent=1 // pred_region
      %22 = dma.done [#allocation3], 256
    $region9: #{tpu_custom_call.1} parent=1 // pred_fallthru
      _
    %v23 = vld [vmem:[#allocation2] sm:$0xff]
    %v24 = vld [vmem:[#allocation2 + $0x8] sm:$0xff]
    %25 = vst [vmem:[#allocation5] sm:$0xff] %v23
    %26 = vst [vmem:[#allocation5 + $0x8] sm:$0xff] %v24
    %v27 = vand.u32 2147483647, %v23
    %vm28 = vcmp.le.f32.partialorder %v27, 0.7853982
    %vm29 = vcmp.lt.s32.totalorder %v23, 0
    %v30 = vand.u32 %v23, 2139095040
    %v31 = vshrl.u32 %v30, 23
    %v32 = vsub.s32 %v31, 127
    %v33 = vand.u32 2147483647, %v23
    %v34 = vand.u32 %v33, 8388607
    %v35 = vor.u32 %v34, 8388608
    %v36 = vsub.s32 0, %v35
    %v37 = vadd.s32 %v32, 1
    %vm38 = vcmp.gt.s32.totalorder %v37, 0
    %v39 = vsel %vm38, %v37, 0
    %v40 = vshrl.u32 %v39, 5
    %v41 = vand.u32 %v39, 31
    %v42 = vsub.s32 32, %v41
    %v43 = vshrl.u32 683565275, %v42
    %v44 = vshll.u32 683565275, %v41
    %v45 = vshrl.u32 2475754826, %v42
    %v46 = vor.u32 %v44, %v45
    %v47 = vshll.u32 2475754826, %v41
    %v48 = vshrl.u32 2131351028, %v42
    %v49 = vor.u32 %v47, %v48
    %v50 = vshll.u32 2131351028, %v41
    %v51 = vshrl.u32 2102212464, %v42
    %v52 = vor.u32 %v50, %v51
    %v53 = vshll.u32 2102212464, %v41
    %v54 = vshrl.u32 920167782, %v42
    %v55 = vor.u32 %v53, %v54
    %v56 = vshll.u32 920167782, %v41
    %v57 = vshrl.u32 1326507024, %v42
    %v58 = vor.u32 %v56, %v57
    %vm59 = vcmp.lt.s32.totalorder %v40, 1
    %vm60 = vcmp.lt.s32.totalorder %v40, 2
    %vm61 = vcmp.lt.s32.totalorder %v40, 3
    %vm62 = vcmp.lt.s32.totalorder %v40, 4
    %v63 = vsel %vm59, %v43, %v46
    %v64 = vsel %vm62, %v52, 2102212464
    %v65 = vsel %vm61, %v49, %v64
    %v66 = vsel %vm60, %v63, %v65
    %v67 = vsel %vm59, %v46, %v49
    %v68 = vsel %vm62, %v55, 920167782
    %v69 = vsel %vm61, %v52, %v68
    %v70 = vsel %vm60, %v67, %v69
    %v71 = vsel %vm59, %v49, %v52
    %v72 = vsel %vm62, %v58, 1326507024
    %v73 = vsel %vm61, %v55, %v72
    %v74 = vsel %vm60, %v71, %v73
    %v75 = vshll.u32 %v35, 8
    %v76 = vmul.u32.u64.compose %v75, %v74
    %v77 = vextract.low.u32 %v76
    %v78 = vextract.high.u32 %v76
    %v79 = vmul.u32.u64.compose %v75, %v70
    %v80 = vextract.low.u32 %v79
    %v81 = vextract.high.u32 %v79
    %v82 = vmul.u32 %v75, %v66
    %v83 = vadd.s32 %v78, %v80
    %vm84 = vc.u32 %v78, %v80
    %v85 = vadd.s32 %v81, 1
    %v86 = vsel %vm84, %v85, %v81
    %v87 = vadd.s32 %v82, %v86
    %v88 = vadd.s32 %v87, 536870912
    %v89 = vshrl.u32 %v88, 30
    %v90 = vshll.u32 %v89, 30
    %v91 = vsub.s32 %v87, %v90
    %vm92 = vcmp.lt.s32.totalorder %v91, 0
    %v93 = vsub.s32 0, %v91
    %v94 = vsel %vm92, %v93, %v91
    %v95 = vclz %v94
    %v96 = vsub.s32 %v95, 2
    %vm97 = vcmp.gt.s32.totalorder 0, %v96
    %v98 = vsel %vm97, 0, %v96
    %v99 = vsub.s32 32, %v98
    %v100 = vshll.u32 %v91, %v98
    %v101 = vshrl.u32 %v83, %v99
    %v102 = vor.u32 %v100, %v101
    %v103 = vsub.s32 4294967266, %v98
    %v104 = vadd.s32 %v103, 127
    %v105 = vshll.u32 %v104, 23
    %v106 = vor.u32 4788187, %v105
    %v107 = vand.u32 2147483647, %v106
    %v109 = vcvt.s32.f32 %v102
    %v110 = vmul.f32 %v109, %v107
    %v111 = vxor.u32 %v110, 2147483648
    %v112 = vsel %vm29, %v111, %v110
    %v113 = vsub.s32 4, %v89
    %v114 = vsel %vm29, %v113, %v89
    %v115 = vsel %vm28, %v23, %v112
    %v116 = vsel %vm28, 0, %v114
    %v117 = vcosq.f32.pop %v115
    %v118 = vsinq.f32.pop %v115
    %vm119 = vweird.f32 %v23
    %v120 = vadd.s32 %v116, 3
    %v121 = vand.u32 %v120, 3
    %vm122 = vcmp.lt.s32.totalorder %v121, 2
    %vm123 = vcmp.eq.s32.totalorder %v121, 0
    %v124 = vxor.u32 %v118, 2147483648
    %v125 = vsel %vm123, %v117, %v124
    %vm126 = vcmp.eq.s32.totalorder %v121, 2
    %v127 = vxor.u32 %v117, 2147483648
    %v128 = vsel %vm126, %v127, %v118
    %v129 = vsel %vm122, %v125, %v128
    %v130 = vsel %vm119, nan, %v129
    %v131 = vand.u32 2147483647, %v24
    %vm132 = vcmp.le.f32.partialorder %v131, 0.7853982
    %vm133 = vcmp.lt.s32.totalorder %v24, 0
    %v134 = vand.u32 %v24, 2139095040
    %v135 = vshrl.u32 %v134, 23
    %v136 = vsub.s32 %v135, 127
    %v137 = vand.u32 2147483647, %v24
    %v138 = vand.u32 %v137, 8388607
    %v139 = vor.u32 %v138, 8388608
    %v140 = vsub.s32 0, %v139
    %v141 = vadd.s32 %v136, 1
    %vm142 = vcmp.gt.s32.totalorder %v141, 0
    %v143 = vsel %vm142, %v141, 0
    %v144 = vshrl.u32 %v143, 5
    %v145 = vand.u32 %v143, 31
    %v146 = vsub.s32 32, %v145
    %v147 = vshrl.u32 683565275, %v146
    %v148 = vshll.u32 683565275, %v145
    %v149 = vshrl.u32 2475754826, %v146
    %v150 = vor.u32 %v148, %v149
    %v151 = vshll.u32 2475754826, %v145
    %v152 = vshrl.u32 2131351028, %v146
    %v153 = vor.u32 %v151, %v152
    %v154 = vshll.u32 2131351028, %v145
    %v155 = vshrl.u32 2102212464, %v146
    %v156 = vor.u32 %v154, %v155
    %v157 = vshll.u32 2102212464, %v145
    %v158 = vshrl.u32 920167782, %v146
    %v159 = vor.u32 %v157, %v158
    %v160 = vshll.u32 920167782, %v145
    %v161 = vshrl.u32 1326507024, %v146
    %v162 = vor.u32 %v160, %v161
    %vm163 = vcmp.lt.s32.totalorder %v144, 1
    %vm164 = vcmp.lt.s32.totalorder %v144, 2
    %vm165 = vcmp.lt.s32.totalorder %v144, 3
    %vm166 = vcmp.lt.s32.totalorder %v144, 4
    %v167 = vsel %vm163, %v147, %v150
    %v168 = vsel %vm166, %v156, 2102212464
    %v169 = vsel %vm165, %v153, %v168
    %v170 = vsel %vm164, %v167, %v169
    %v171 = vsel %vm163, %v150, %v153
    %v172 = vsel %vm166, %v159, 920167782
    %v173 = vsel %vm165, %v156, %v172
    %v174 = vsel %vm164, %v171, %v173
    %v175 = vsel %vm163, %v153, %v156
    %v176 = vsel %vm166, %v162, 1326507024
    %v177 = vsel %vm165, %v159, %v176
    %v178 = vsel %vm164, %v175, %v177
    %v179 = vshll.u32 %v139, 8
    %v180 = vmul.u32.u64.compose %v179, %v178
    %v181 = vextract.low.u32 %v180
    %v182 = vextract.high.u32 %v180
    %v183 = vmul.u32.u64.compose %v179, %v174
    %v184 = vextract.low.u32 %v183
    %v185 = vextract.high.u32 %v183
    %v186 = vmul.u32 %v179, %v170
    %v187 = vadd.s32 %v182, %v184
    %vm188 = vc.u32 %v182, %v184
    %v189 = vadd.s32 %v185, 1
    %v190 = vsel %vm188, %v189, %v185
    %v191 = vadd.s32 %v186, %v190
    %v192 = vadd.s32 %v191, 536870912
    %v193 = vshrl.u32 %v192, 30
    %v194 = vshll.u32 %v193, 30
    %v195 = vsub.s32 %v191, %v194
    %vm196 = vcmp.lt.s32.totalorder %v195, 0
    %v197 = vsub.s32 0, %v195
    %v198 = vsel %vm196, %v197, %v195
    %v199 = vclz %v198
    %v200 = vsub.s32 %v199, 2
    %vm201 = vcmp.gt.s32.totalorder 0, %v200
    %v202 = vsel %vm201, 0, %v200
    %v203 = vsub.s32 32, %v202
    %v204 = vshll.u32 %v195, %v202
    %v205 = vshrl.u32 %v187, %v203
    %v206 = vor.u32 %v204, %v205
    %v207 = vsub.s32 4294967266, %v202
    %v208 = vadd.s32 %v207, 127
    %v209 = vshll.u32 %v208, 23
    %v210 = vor.u32 4788187, %v209
    %v211 = vand.u32 2147483647, %v210
    %v213 = vcvt.s32.f32 %v206
    %v214 = vmul.f32 %v213, %v211
    %v215 = vxor.u32 %v214, 2147483648
    %v216 = vsel %vm133, %v215, %v214
    %v217 = vsub.s32 4, %v193
    %v218 = vsel %vm133, %v217, %v193
    %v219 = vsel %vm132, %v24, %v216
    %v220 = vsel %vm132, 0, %v218
    %v221 = vcosq.f32.pop %v219
    %v222 = vsinq.f32.pop %v219
    %vm223 = vweird.f32 %v24
    %v224 = vadd.s32 %v220, 3
    %v225 = vand.u32 %v224, 3
    %vm226 = vcmp.lt.s32.totalorder %v225, 2
    %vm227 = vcmp.eq.s32.totalorder %v225, 0
    %v228 = vxor.u32 %v222, 2147483648
    %v229 = vsel %vm227, %v221, %v228
    %vm230 = vcmp.eq.s32.totalorder %v225, 2
    %v231 = vxor.u32 %v221, 2147483648
    %v232 = vsel %vm230, %v231, %v222
    %v233 = vsel %vm226, %v229, %v232
    %v234 = vsel %vm223, nan, %v233
    %s235 = scalar_lea.vmem [#allocation5], 16
    %236 = vst [vmem:[%s235] sm:$0xff] %v130
    %237 = vst [vmem:[%s235 + $0x8] sm:$0xff] %v234
    %v238 = vand.u32 2147483647, %v23
    %vm239 = vcmp.le.f32.partialorder %v238, 0.7853982
    %vm240 = vcmp.lt.s32.totalorder %v23, 0
    %v241 = vand.u32 %v23, 2139095040
    %v242 = vshrl.u32 %v241, 23
    %v243 = vsub.s32 %v242, 127
    %v244 = vand.u32 2147483647, %v23
    %v245 = vand.u32 %v244, 8388607
    %v246 = vor.u32 %v245, 8388608
    %v247 = vsub.s32 0, %v246
    %v248 = vadd.s32 %v243, 1
    %vm249 = vcmp.gt.s32.totalorder %v248, 0
    %v250 = vsel %vm249, %v248, 0
    %v251 = vshrl.u32 %v250, 5
    %v252 = vand.u32 %v250, 31
    %v253 = vsub.s32 32, %v252
    %v254 = vshrl.u32 683565275, %v253
    %v255 = vshll.u32 683565275, %v252
    %v256 = vshrl.u32 2475754826, %v253
    %v257 = vor.u32 %v255, %v256
    %v258 = vshll.u32 2475754826, %v252
    %v259 = vshrl.u32 2131351028, %v253
    %v260 = vor.u32 %v258, %v259
    %v261 = vshll.u32 2131351028, %v252
    %v262 = vshrl.u32 2102212464, %v253
    %v263 = vor.u32 %v261, %v262
    %v264 = vshll.u32 2102212464, %v252
    %v265 = vshrl.u32 920167782, %v253
    %v266 = vor.u32 %v264, %v265
    %v267 = vshll.u32 920167782, %v252
    %v268 = vshrl.u32 1326507024, %v253
    %v269 = vor.u32 %v267, %v268
    %vm270 = vcmp.lt.s32.totalorder %v251, 1
    %vm271 = vcmp.lt.s32.totalorder %v251, 2
    %vm272 = vcmp.lt.s32.totalorder %v251, 3
    %vm273 = vcmp.lt.s32.totalorder %v251, 4
    %v274 = vsel %vm270, %v254, %v257
    %v275 = vsel %vm273, %v263, 2102212464
    %v276 = vsel %vm272, %v260, %v275
    %v277 = vsel %vm271, %v274, %v276
    %v278 = vsel %vm270, %v257, %v260
    %v279 = vsel %vm273, %v266, 920167782
    %v280 = vsel %vm272, %v263, %v279
    %v281 = vsel %vm271, %v278, %v280
    %v282 = vsel %vm270, %v260, %v263
    %v283 = vsel %vm273, %v269, 1326507024
    %v284 = vsel %vm272, %v266, %v283
    %v285 = vsel %vm271, %v282, %v284
    %v286 = vshll.u32 %v246, 8
    %v287 = vmul.u32.u64.compose %v286, %v285
    %v288 = vextract.low.u32 %v287
    %v289 = vextract.high.u32 %v287
    %v290 = vmul.u32.u64.compose %v286, %v281
    %v291 = vextract.low.u32 %v290
    %v292 = vextract.high.u32 %v290
    %v293 = vmul.u32 %v286, %v277
    %v294 = vadd.s32 %v289, %v291
    %vm295 = vc.u32 %v289, %v291
    %v296 = vadd.s32 %v292, 1
    %v297 = vsel %vm295, %v296, %v292
    %v298 = vadd.s32 %v293, %v297
    %v299 = vadd.s32 %v298, 536870912
    %v300 = vshrl.u32 %v299, 30
    %v301 = vshll.u32 %v300, 30
    %v302 = vsub.s32 %v298, %v301
    %vm303 = vcmp.lt.s32.totalorder %v302, 0
    %v304 = vsub.s32 0, %v302
    %v305 = vsel %vm303, %v304, %v302
    %v306 = vclz %v305
    %v307 = vsub.s32 %v306, 2
    %vm308 = vcmp.gt.s32.totalorder 0, %v307
    %v309 = vsel %vm308, 0, %v307
    %v310 = vsub.s32 32, %v309
    %v311 = vshll.u32 %v302, %v309
    %v312 = vshrl.u32 %v294, %v310
    %v313 = vor.u32 %v311, %v312
    %v314 = vsub.s32 4294967266, %v309
    %v315 = vadd.s32 %v314, 127
    %v316 = vshll.u32 %v315, 23
    %v317 = vor.u32 4788187, %v316
    %v318 = vand.u32 2147483647, %v317
    %v320 = vcvt.s32.f32 %v313
    %v321 = vmul.f32 %v320, %v318
    %v322 = vxor.u32 %v321, 2147483648
    %v323 = vsel %vm240, %v322, %v321
    %v324 = vsub.s32 4, %v300
    %v325 = vsel %vm240, %v324, %v300
    %v326 = vsel %vm239, %v23, %v323
    %v327 = vsel %vm239, 0, %v325
    %v328 = vcosq.f32.pop %v326
    %v329 = vsinq.f32.pop %v326
    %vm330 = vweird.f32 %v23
    %v331 = vand.u32 %v327, 3
    %vm332 = vcmp.lt.s32.totalorder %v331, 2
    %vm333 = vcmp.eq.s32.totalorder %v331, 0
    %v334 = vxor.u32 %v329, 2147483648
    %v335 = vsel %vm333, %v328, %v334
    %vm336 = vcmp.eq.s32.totalorder %v331, 2
    %v337 = vxor.u32 %v328, 2147483648
    %v338 = vsel %vm336, %v337, %v329
    %v339 = vsel %vm332, %v335, %v338
    %v340 = vsel %vm330, nan, %v339
    %v341 = vand.u32 2147483647, %v24
    %vm342 = vcmp.le.f32.partialorder %v341, 0.7853982
    %vm343 = vcmp.lt.s32.totalorder %v24, 0
    %v344 = vand.u32 %v24, 2139095040
    %v345 = vshrl.u32 %v344, 23
    %v346 = vsub.s32 %v345, 127
    %v347 = vand.u32 2147483647, %v24
    %v348 = vand.u32 %v347, 8388607
    %v349 = vor.u32 %v348, 8388608
    %v350 = vsub.s32 0, %v349
    %v351 = vadd.s32 %v346, 1
    %vm352 = vcmp.gt.s32.totalorder %v351, 0
    %v353 = vsel %vm352, %v351, 0
    %v354 = vshrl.u32 %v353, 5
    %v355 = vand.u32 %v353, 31
    %v356 = vsub.s32 32, %v355
    %v357 = vshrl.u32 683565275, %v356
    %v358 = vshll.u32 683565275, %v355
    %v359 = vshrl.u32 2475754826, %v356
    %v360 = vor.u32 %v358, %v359
    %v361 = vshll.u32 2475754826, %v355
    %v362 = vshrl.u32 2131351028, %v356
    %v363 = vor.u32 %v361, %v362
    %v364 = vshll.u32 2131351028, %v355
    %v365 = vshrl.u32 2102212464, %v356
    %v366 = vor.u32 %v364, %v365
    %v367 = vshll.u32 2102212464, %v355
    %v368 = vshrl.u32 920167782, %v356
    %v369 = vor.u32 %v367, %v368
    %v370 = vshll.u32 920167782, %v355
    %v371 = vshrl.u32 1326507024, %v356
    %v372 = vor.u32 %v370, %v371
    %vm373 = vcmp.lt.s32.totalorder %v354, 1
    %vm374 = vcmp.lt.s32.totalorder %v354, 2
    %vm375 = vcmp.lt.s32.totalorder %v354, 3
    %vm376 = vcmp.lt.s32.totalorder %v354, 4
    %v377 = vsel %vm373, %v357, %v360
    %v378 = vsel %vm376, %v366, 2102212464
    %v379 = vsel %vm375, %v363, %v378
    %v380 = vsel %vm374, %v377, %v379
    %v381 = vsel %vm373, %v360, %v363
    %v382 = vsel %vm376, %v369, 920167782
    %v383 = vsel %vm375, %v366, %v382
    %v384 = vsel %vm374, %v381, %v383
    %v385 = vsel %vm373, %v363, %v366
    %v386 = vsel %vm376, %v372, 1326507024
    %v387 = vsel %vm375, %v369, %v386
    %v388 = vsel %vm374, %v385, %v387
    %v389 = vshll.u32 %v349, 8
    %v390 = vmul.u32.u64.compose %v389, %v388
    %v391 = vextract.low.u32 %v390
    %v392 = vextract.high.u32 %v390
    %v393 = vmul.u32.u64.compose %v389, %v384
    %v394 = vextract.low.u32 %v393
    %v395 = vextract.high.u32 %v393
    %v396 = vmul.u32 %v389, %v380
    %v397 = vadd.s32 %v392, %v394
    %vm398 = vc.u32 %v392, %v394
    %v399 = vadd.s32 %v395, 1
    %v400 = vsel %vm398, %v399, %v395
    %v401 = vadd.s32 %v396, %v400
    %v402 = vadd.s32 %v401, 536870912
    %v403 = vshrl.u32 %v402, 30
    %v404 = vshll.u32 %v403, 30
    %v405 = vsub.s32 %v401, %v404
    %vm406 = vcmp.lt.s32.totalorder %v405, 0
    %v407 = vsub.s32 0, %v405
    %v408 = vsel %vm406, %v407, %v405
    %v409 = vclz %v408
    %v410 = vsub.s32 %v409, 2
    %vm411 = vcmp.gt.s32.totalorder 0, %v410
    %v412 = vsel %vm411, 0, %v410
    %v413 = vsub.s32 32, %v412
    %v414 = vshll.u32 %v405, %v412
    %v415 = vshrl.u32 %v397, %v413
    %v416 = vor.u32 %v414, %v415
    %v417 = vsub.s32 4294967266, %v412
    %v418 = vadd.s32 %v417, 127
    %v419 = vshll.u32 %v418, 23
    %v420 = vor.u32 4788187, %v419
    %v421 = vand.u32 2147483647, %v420
    %v423 = vcvt.s32.f32 %v416
    %v424 = vmul.f32 %v423, %v421
    %v425 = vxor.u32 %v424, 2147483648
    %v426 = vsel %vm343, %v425, %v424
    %v427 = vsub.s32 4, %v403
    %v428 = vsel %vm343, %v427, %v403
    %v429 = vsel %vm342, %v24, %v426
    %v430 = vsel %vm342, 0, %v428
    %v431 = vcosq.f32.pop %v429
    %v432 = vsinq.f32.pop %v429
    %vm433 = vweird.f32 %v24
    %v434 = vand.u32 %v430, 3
    %vm435 = vcmp.lt.s32.totalorder %v434, 2
    %vm436 = vcmp.eq.s32.totalorder %v434, 0
    %v437 = vxor.u32 %v432, 2147483648
    %v438 = vsel %vm436, %v431, %v437
    %vm439 = vcmp.eq.s32.totalorder %v434, 2
    %v440 = vxor.u32 %v431, 2147483648
    %v441 = vsel %vm439, %v440, %v432
    %v442 = vsel %vm435, %v438, %v441
    %v443 = vsel %vm433, nan, %v442
    %s444 = scalar_lea.vmem [#allocation5], 32
    %445 = vst [vmem:[%s444] sm:$0xff] %v340
    %446 = vst [vmem:[%s444 + $0x8] sm:$0xff] %v443
    %v447 = vmul.f32 %v23, 3.3333333
    %v448 = vmul.f32 %v24, 3.3333333
    %v449 = vand.u32 2147483647, %v447
    %vm450 = vcmp.le.f32.partialorder %v449, 0.7853982
    %vm451 = vcmp.lt.s32.totalorder %v447, 0
    %v452 = vand.u32 %v447, 2139095040
    %v453 = vshrl.u32 %v452, 23
    %v454 = vsub.s32 %v453, 127
    %v455 = vand.u32 2147483647, %v447
    %v456 = vand.u32 %v455, 8388607
    %v457 = vor.u32 %v456, 8388608
    %v458 = vsub.s32 0, %v457
    %v459 = vadd.s32 %v454, 1
    %vm460 = vcmp.gt.s32.totalorder %v459, 0
    %v461 = vsel %vm460, %v459, 0
    %v462 = vshrl.u32 %v461, 5
    %v463 = vand.u32 %v461, 31
    %v464 = vsub.s32 32, %v463
    %v465 = vshrl.u32 683565275, %v464
    %v466 = vshll.u32 683565275, %v463
    %v467 = vshrl.u32 2475754826, %v464
    %v468 = vor.u32 %v466, %v467
    %v469 = vshll.u32 2475754826, %v463
    %v470 = vshrl.u32 2131351028, %v464
    %v471 = vor.u32 %v469, %v470
    %v472 = vshll.u32 2131351028, %v463
    %v473 = vshrl.u32 2102212464, %v464
    %v474 = vor.u32 %v472, %v473
    %v475 = vshll.u32 2102212464, %v463
    %v476 = vshrl.u32 920167782, %v464
    %v477 = vor.u32 %v475, %v476
    %v478 = vshll.u32 920167782, %v463
    %v479 = vshrl.u32 1326507024, %v464
    %v480 = vor.u32 %v478, %v479
    %vm481 = vcmp.lt.s32.totalorder %v462, 1
    %vm482 = vcmp.lt.s32.totalorder %v462, 2
    %vm483 = vcmp.lt.s32.totalorder %v462, 3
    %vm484 = vcmp.lt.s32.totalorder %v462, 4
    %v485 = vsel %vm481, %v465, %v468
    %v486 = vsel %vm484, %v474, 2102212464
    %v487 = vsel %vm483, %v471, %v486
    %v488 = vsel %vm482, %v485, %v487
    %v489 = vsel %vm481, %v468, %v471
    %v490 = vsel %vm484, %v477, 920167782
    %v491 = vsel %vm483, %v474, %v490
    %v492 = vsel %vm482, %v489, %v491
    %v493 = vsel %vm481, %v471, %v474
    %v494 = vsel %vm484, %v480, 1326507024
    %v495 = vsel %vm483, %v477, %v494
    %v496 = vsel %vm482, %v493, %v495
    %v497 = vshll.u32 %v457, 8
    %v498 = vmul.u32.u64.compose %v497, %v496
    %v499 = vextract.low.u32 %v498
    %v500 = vextract.high.u32 %v498
    %v501 = vmul.u32.u64.compose %v497, %v492
    %v502 = vextract.low.u32 %v501
    %v503 = vextract.high.u32 %v501
    %v504 = vmul.u32 %v497, %v488
    %v505 = vadd.s32 %v500, %v502
    %vm506 = vc.u32 %v500, %v502
    %v507 = vadd.s32 %v503, 1
    %v508 = vsel %vm506, %v507, %v503
    %v509 = vadd.s32 %v504, %v508
    %v510 = vadd.s32 %v509, 536870912
    %v511 = vshrl.u32 %v510, 30
    %v512 = vshll.u32 %v511, 30
    %v513 = vsub.s32 %v509, %v512
    %vm514 = vcmp.lt.s32.totalorder %v513, 0
    %v515 = vsub.s32 0, %v513
    %v516 = vsel %vm514, %v515, %v513
    %v517 = vclz %v516
    %v518 = vsub.s32 %v517, 2
    %vm519 = vcmp.gt.s32.totalorder 0, %v518
    %v520 = vsel %vm519, 0, %v518
    %v521 = vsub.s32 32, %v520
    %v522 = vshll.u32 %v513, %v520
    %v523 = vshrl.u32 %v505, %v521
    %v524 = vor.u32 %v522, %v523
    %v525 = vsub.s32 4294967266, %v520
    %v526 = vadd.s32 %v525, 127
    %v527 = vshll.u32 %v526, 23
    %v528 = vor.u32 4788187, %v527
    %v529 = vand.u32 2147483647, %v528
    %v531 = vcvt.s32.f32 %v524
    %v532 = vmul.f32 %v531, %v529
    %v533 = vxor.u32 %v532, 2147483648
    %v534 = vsel %vm451, %v533, %v532
    %v535 = vsub.s32 4, %v511
    %v536 = vsel %vm451, %v535, %v511
    %v537 = vsel %vm450, %v447, %v534
    %v538 = vsel %vm450, 0, %v536
    %v539 = vcosq.f32.pop %v537
    %v540 = vsinq.f32.pop %v537
    %vm541 = vweird.f32 %v447
    %v542 = vadd.s32 %v538, 3
    %v543 = vand.u32 %v542, 3
    %vm544 = vcmp.lt.s32.totalorder %v543, 2
    %vm545 = vcmp.eq.s32.totalorder %v543, 0
    %v546 = vxor.u32 %v540, 2147483648
    %v547 = vsel %vm545, %v539, %v546
    %vm548 = vcmp.eq.s32.totalorder %v543, 2
    %v549 = vxor.u32 %v539, 2147483648
    %v550 = vsel %vm548, %v549, %v540
    %v551 = vsel %vm544, %v547, %v550
    %v552 = vsel %vm541, nan, %v551
    %v553 = vand.u32 2147483647, %v448
    %vm554 = vcmp.le.f32.partialorder %v553, 0.7853982
    %vm555 = vcmp.lt.s32.totalorder %v448, 0
    %v556 = vand.u32 %v448, 2139095040
    %v557 = vshrl.u32 %v556, 23
    %v558 = vsub.s32 %v557, 127
    %v559 = vand.u32 2147483647, %v448
    %v560 = vand.u32 %v559, 8388607
    %v561 = vor.u32 %v560, 8388608
    %v562 = vsub.s32 0, %v561
    %v563 = vadd.s32 %v558, 1
    %vm564 = vcmp.gt.s32.totalorder %v563, 0
    %v565 = vsel %vm564, %v563, 0
    %v566 = vshrl.u32 %v565, 5
    %v567 = vand.u32 %v565, 31
    %v568 = vsub.s32 32, %v567
    %v569 = vshrl.u32 683565275, %v568
    %v570 = vshll.u32 683565275, %v567
    %v571 = vshrl.u32 2475754826, %v568
    %v572 = vor.u32 %v570, %v571
    %v573 = vshll.u32 2475754826, %v567
    %v574 = vshrl.u32 2131351028, %v568
    %v575 = vor.u32 %v573, %v574
    %v576 = vshll.u32 2131351028, %v567
    %v577 = vshrl.u32 2102212464, %v568
    %v578 = vor.u32 %v576, %v577
    %v579 = vshll.u32 2102212464, %v567
    %v580 = vshrl.u32 920167782, %v568
    %v581 = vor.u32 %v579, %v580
    %v582 = vshll.u32 920167782, %v567
    %v583 = vshrl.u32 1326507024, %v568
    %v584 = vor.u32 %v582, %v583
    %vm585 = vcmp.lt.s32.totalorder %v566, 1
    %vm586 = vcmp.lt.s32.totalorder %v566, 2
    %vm587 = vcmp.lt.s32.totalorder %v566, 3
    %vm588 = vcmp.lt.s32.totalorder %v566, 4
    %v589 = vsel %vm585, %v569, %v572
    %v590 = vsel %vm588, %v578, 2102212464
    %v591 = vsel %vm587, %v575, %v590
    %v592 = vsel %vm586, %v589, %v591
    %v593 = vsel %vm585, %v572, %v575
    %v594 = vsel %vm588, %v581, 920167782
    %v595 = vsel %vm587, %v578, %v594
    %v596 = vsel %vm586, %v593, %v595
    %v597 = vsel %vm585, %v575, %v578
    %v598 = vsel %vm588, %v584, 1326507024
    %v599 = vsel %vm587, %v581, %v598
    %v600 = vsel %vm586, %v597, %v599
    %v601 = vshll.u32 %v561, 8
    %v602 = vmul.u32.u64.compose %v601, %v600
    %v603 = vextract.low.u32 %v602
    %v604 = vextract.high.u32 %v602
    %v605 = vmul.u32.u64.compose %v601, %v596
    %v606 = vextract.low.u32 %v605
    %v607 = vextract.high.u32 %v605
    %v608 = vmul.u32 %v601, %v592
    %v609 = vadd.s32 %v604, %v606
    %vm610 = vc.u32 %v604, %v606
    %v611 = vadd.s32 %v607, 1
    %v612 = vsel %vm610, %v611, %v607
    %v613 = vadd.s32 %v608, %v612
    %v614 = vadd.s32 %v613, 536870912
    %v615 = vshrl.u32 %v614, 30
    %v616 = vshll.u32 %v615, 30
    %v617 = vsub.s32 %v613, %v616
    %vm618 = vcmp.lt.s32.totalorder %v617, 0
    %v619 = vsub.s32 0, %v617
    %v620 = vsel %vm618, %v619, %v617
    %v621 = vclz %v620
    %v622 = vsub.s32 %v621, 2
    %vm623 = vcmp.gt.s32.totalorder 0, %v622
    %v624 = vsel %vm623, 0, %v622
    %v625 = vsub.s32 32, %v624
    %v626 = vshll.u32 %v617, %v624
    %v627 = vshrl.u32 %v609, %v625
    %v628 = vor.u32 %v626, %v627
    %v629 = vsub.s32 4294967266, %v624
    %v630 = vadd.s32 %v629, 127
    %v631 = vshll.u32 %v630, 23
    %v632 = vor.u32 4788187, %v631
    %v633 = vand.u32 2147483647, %v632
    %v635 = vcvt.s32.f32 %v628
    %v636 = vmul.f32 %v635, %v633
    %v637 = vxor.u32 %v636, 2147483648
    %v638 = vsel %vm555, %v637, %v636
    %v639 = vsub.s32 4, %v615
    %v640 = vsel %vm555, %v639, %v615
    %v641 = vsel %vm554, %v448, %v638
    %v642 = vsel %vm554, 0, %v640
    %v643 = vcosq.f32.pop %v641
    %v644 = vsinq.f32.pop %v641
    %vm645 = vweird.f32 %v448
    %v646 = vadd.s32 %v642, 3
    %v647 = vand.u32 %v646, 3
    %vm648 = vcmp.lt.s32.totalorder %v647, 2
    %vm649 = vcmp.eq.s32.totalorder %v647, 0
    %v650 = vxor.u32 %v644, 2147483648
    %v651 = vsel %vm649, %v643, %v650
    %vm652 = vcmp.eq.s32.totalorder %v647, 2
    %v653 = vxor.u32 %v643, 2147483648
    %v654 = vsel %vm652, %v653, %v644
    %v655 = vsel %vm648, %v651, %v654
    %v656 = vsel %vm645, nan, %v655
    %s657 = scalar_lea.vmem [#allocation5], 48
    %658 = vst [vmem:[%s657] sm:$0xff] %v552
    %659 = vst [vmem:[%s657 + $0x8] sm:$0xff] %v656
    %v660 = vand.u32 2147483647, %v447
    %vm661 = vcmp.le.f32.partialorder %v660, 0.7853982
    %vm662 = vcmp.lt.s32.totalorder %v447, 0
    %v663 = vand.u32 %v447, 2139095040
    %v664 = vshrl.u32 %v663, 23
    %v665 = vsub.s32 %v664, 127
    %v666 = vand.u32 2147483647, %v447
    %v667 = vand.u32 %v666, 8388607
    %v668 = vor.u32 %v667, 8388608
    %v669 = vsub.s32 0, %v668
    %v670 = vadd.s32 %v665, 1
    %vm671 = vcmp.gt.s32.totalorder %v670, 0
    %v672 = vsel %vm671, %v670, 0
    %v673 = vshrl.u32 %v672, 5
    %v674 = vand.u32 %v672, 31
    %v675 = vsub.s32 32, %v674
    %v676 = vshrl.u32 683565275, %v675
    %v677 = vshll.u32 683565275, %v674
    %v678 = vshrl.u32 2475754826, %v675
    %v679 = vor.u32 %v677, %v678
    %v680 = vshll.u32 2475754826, %v674
    %v681 = vshrl.u32 2131351028, %v675
    %v682 = vor.u32 %v680, %v681
    %v683 = vshll.u32 2131351028, %v674
    %v684 = vshrl.u32 2102212464, %v675
    %v685 = vor.u32 %v683, %v684
    %v686 = vshll.u32 2102212464, %v674
    %v687 = vshrl.u32 920167782, %v675
    %v688 = vor.u32 %v686, %v687
    %v689 = vshll.u32 920167782, %v674
    %v690 = vshrl.u32 1326507024, %v675
    %v691 = vor.u32 %v689, %v690
    %vm692 = vcmp.lt.s32.totalorder %v673, 1
    %vm693 = vcmp.lt.s32.totalorder %v673, 2
    %vm694 = vcmp.lt.s32.totalorder %v673, 3
    %vm695 = vcmp.lt.s32.totalorder %v673, 4
    %v696 = vsel %vm692, %v676, %v679
    %v697 = vsel %vm695, %v685, 2102212464
    %v698 = vsel %vm694, %v682, %v697
    %v699 = vsel %vm693, %v696, %v698
    %v700 = vsel %vm692, %v679, %v682
    %v701 = vsel %vm695, %v688, 920167782
    %v702 = vsel %vm694, %v685, %v701
    %v703 = vsel %vm693, %v700, %v702
    %v704 = vsel %vm692, %v682, %v685
    %v705 = vsel %vm695, %v691, 1326507024
    %v706 = vsel %vm694, %v688, %v705
    %v707 = vsel %vm693, %v704, %v706
    %v708 = vshll.u32 %v668, 8
    %v709 = vmul.u32.u64.compose %v708, %v707
    %v710 = vextract.low.u32 %v709
    %v711 = vextract.high.u32 %v709
    %v712 = vmul.u32.u64.compose %v708, %v703
    %v713 = vextract.low.u32 %v712
    %v714 = vextract.high.u32 %v712
    %v715 = vmul.u32 %v708, %v699
    %v716 = vadd.s32 %v711, %v713
    %vm717 = vc.u32 %v711, %v713
    %v718 = vadd.s32 %v714, 1
    %v719 = vsel %vm717, %v718, %v714
    %v720 = vadd.s32 %v715, %v719
    %v721 = vadd.s32 %v720, 536870912
    %v722 = vshrl.u32 %v721, 30
    %v723 = vshll.u32 %v722, 30
    %v724 = vsub.s32 %v720, %v723
    %vm725 = vcmp.lt.s32.totalorder %v724, 0
    %v726 = vsub.s32 0, %v724
    %v727 = vsel %vm725, %v726, %v724
    %v728 = vclz %v727
    %v729 = vsub.s32 %v728, 2
    %vm730 = vcmp.gt.s32.totalorder 0, %v729
    %v731 = vsel %vm730, 0, %v729
    %v732 = vsub.s32 32, %v731
    %v733 = vshll.u32 %v724, %v731
    %v734 = vshrl.u32 %v716, %v732
    %v735 = vor.u32 %v733, %v734
    %v736 = vsub.s32 4294967266, %v731
    %v737 = vadd.s32 %v736, 127
    %v738 = vshll.u32 %v737, 23
    %v739 = vor.u32 4788187, %v738
    %v740 = vand.u32 2147483647, %v739
    %v742 = vcvt.s32.f32 %v735
    %v743 = vmul.f32 %v742, %v740
    %v744 = vxor.u32 %v743, 2147483648
    %v745 = vsel %vm662, %v744, %v743
    %v746 = vsub.s32 4, %v722
    %v747 = vsel %vm662, %v746, %v722
    %v748 = vsel %vm661, %v447, %v745
    %v749 = vsel %vm661, 0, %v747
    %v750 = vcosq.f32.pop %v748
    %v751 = vsinq.f32.pop %v748
    %vm752 = vweird.f32 %v447
    %v753 = vand.u32 %v749, 3
    %vm754 = vcmp.lt.s32.totalorder %v753, 2
    %vm755 = vcmp.eq.s32.totalorder %v753, 0
    %v756 = vxor.u32 %v751, 2147483648
    %v757 = vsel %vm755, %v750, %v756
    %vm758 = vcmp.eq.s32.totalorder %v753, 2
    %v759 = vxor.u32 %v750, 2147483648
    %v760 = vsel %vm758, %v759, %v751
    %v761 = vsel %vm754, %v757, %v760
    %v762 = vsel %vm752, nan, %v761
    %v763 = vand.u32 2147483647, %v448
    %vm764 = vcmp.le.f32.partialorder %v763, 0.7853982
    %vm765 = vcmp.lt.s32.totalorder %v448, 0
    %v766 = vand.u32 %v448, 2139095040
    %v767 = vshrl.u32 %v766, 23
    %v768 = vsub.s32 %v767, 127
    %v769 = vand.u32 2147483647, %v448
    %v770 = vand.u32 %v769, 8388607
    %v771 = vor.u32 %v770, 8388608
    %v772 = vsub.s32 0, %v771
    %v773 = vadd.s32 %v768, 1
    %vm774 = vcmp.gt.s32.totalorder %v773, 0
    %v775 = vsel %vm774, %v773, 0
    %v776 = vshrl.u32 %v775, 5
    %v777 = vand.u32 %v775, 31
    %v778 = vsub.s32 32, %v777
    %v779 = vshrl.u32 683565275, %v778
    %v780 = vshll.u32 683565275, %v777
    %v781 = vshrl.u32 2475754826, %v778
    %v782 = vor.u32 %v780, %v781
    %v783 = vshll.u32 2475754826, %v777
    %v784 = vshrl.u32 2131351028, %v778
    %v785 = vor.u32 %v783, %v784
    %v786 = vshll.u32 2131351028, %v777
    %v787 = vshrl.u32 2102212464, %v778
    %v788 = vor.u32 %v786, %v787
    %v789 = vshll.u32 2102212464, %v777
    %v790 = vshrl.u32 920167782, %v778
    %v791 = vor.u32 %v789, %v790
    %v792 = vshll.u32 920167782, %v777
    %v793 = vshrl.u32 1326507024, %v778
    %v794 = vor.u32 %v792, %v793
    %vm795 = vcmp.lt.s32.totalorder %v776, 1
    %vm796 = vcmp.lt.s32.totalorder %v776, 2
    %vm797 = vcmp.lt.s32.totalorder %v776, 3
    %vm798 = vcmp.lt.s32.totalorder %v776, 4
    %v799 = vsel %vm795, %v779, %v782
    %v800 = vsel %vm798, %v788, 2102212464
    %v801 = vsel %vm797, %v785, %v800
    %v802 = vsel %vm796, %v799, %v801
    %v803 = vsel %vm795, %v782, %v785
    %v804 = vsel %vm798, %v791, 920167782
    %v805 = vsel %vm797, %v788, %v804
    %v806 = vsel %vm796, %v803, %v805
    %v807 = vsel %vm795, %v785, %v788
    %v808 = vsel %vm798, %v794, 1326507024
    %v809 = vsel %vm797, %v791, %v808
    %v810 = vsel %vm796, %v807, %v809
    %v811 = vshll.u32 %v771, 8
    %v812 = vmul.u32.u64.compose %v811, %v810
    %v813 = vextract.low.u32 %v812
    %v814 = vextract.high.u32 %v812
    %v815 = vmul.u32.u64.compose %v811, %v806
    %v816 = vextract.low.u32 %v815
    %v817 = vextract.high.u32 %v815
    %v818 = vmul.u32 %v811, %v802
    %v819 = vadd.s32 %v814, %v816
    %vm820 = vc.u32 %v814, %v816
    %v821 = vadd.s32 %v817, 1
    %v822 = vsel %vm820, %v821, %v817
    %v823 = vadd.s32 %v818, %v822
    %v824 = vadd.s32 %v823, 536870912
    %v825 = vshrl.u32 %v824, 30
    %v826 = vshll.u32 %v825, 30
    %v827 = vsub.s32 %v823, %v826
    %vm828 = vcmp.lt.s32.totalorder %v827, 0
    %v829 = vsub.s32 0, %v827
    %v830 = vsel %vm828, %v829, %v827
    %v831 = vclz %v830
    %v832 = vsub.s32 %v831, 2
    %vm833 = vcmp.gt.s32.totalorder 0, %v832
    %v834 = vsel %vm833, 0, %v832
    %v835 = vsub.s32 32, %v834
    %v836 = vshll.u32 %v827, %v834
    %v837 = vshrl.u32 %v819, %v835
    %v838 = vor.u32 %v836, %v837
    %v839 = vsub.s32 4294967266, %v834
    %v840 = vadd.s32 %v839, 127
    %v841 = vshll.u32 %v840, 23
    %v842 = vor.u32 4788187, %v841
    %v843 = vand.u32 2147483647, %v842
    %v845 = vcvt.s32.f32 %v838
    %v846 = vmul.f32 %v845, %v843
    %v847 = vxor.u32 %v846, 2147483648
    %v848 = vsel %vm765, %v847, %v846
    %v849 = vsub.s32 4, %v825
    %v850 = vsel %vm765, %v849, %v825
    %v851 = vsel %vm764, %v448, %v848
    %v852 = vsel %vm764, 0, %v850
    %v853 = vcosq.f32.pop %v851
    %v854 = vsinq.f32.pop %v851
    %vm855 = vweird.f32 %v448
    %v856 = vand.u32 %v852, 3
    %vm857 = vcmp.lt.s32.totalorder %v856, 2
    %vm858 = vcmp.eq.s32.totalorder %v856, 0
    %v859 = vxor.u32 %v854, 2147483648
    %v860 = vsel %vm858, %v853, %v859
    %vm861 = vcmp.eq.s32.totalorder %v856, 2
    %v862 = vxor.u32 %v853, 2147483648
    %v863 = vsel %vm861, %v862, %v854
    %v864 = vsel %vm857, %v860, %v863
    %v865 = vsel %vm855, nan, %v864
    %s866 = scalar_lea.vmem [#allocation5], 64
    %867 = vst [vmem:[%s866] sm:$0xff] %v762
    %868 = vst [vmem:[%s866 + $0x8] sm:$0xff] %v865
    %v869 = vmul.f32 %v23, 5.6666665
    %v870 = vmul.f32 %v24, 5.6666665
    %v871 = vand.u32 2147483647, %v869
    %vm872 = vcmp.le.f32.partialorder %v871, 0.7853982
    %vm873 = vcmp.lt.s32.totalorder %v869, 0
    %v874 = vand.u32 %v869, 2139095040
    %v875 = vshrl.u32 %v874, 23
    %v876 = vsub.s32 %v875, 127
    %v877 = vand.u32 2147483647, %v869
    %v878 = vand.u32 %v877, 8388607
    %v879 = vor.u32 %v878, 8388608
    %v880 = vsub.s32 0, %v879
    %v881 = vadd.s32 %v876, 1
    %vm882 = vcmp.gt.s32.totalorder %v881, 0
    %v883 = vsel %vm882, %v881, 0
    %v884 = vshrl.u32 %v883, 5
    %v885 = vand.u32 %v883, 31
    %v886 = vsub.s32 32, %v885
    %v887 = vshrl.u32 683565275, %v886
    %v888 = vshll.u32 683565275, %v885
    %v889 = vshrl.u32 2475754826, %v886
    %v890 = vor.u32 %v888, %v889
    %v891 = vshll.u32 2475754826, %v885
    %v892 = vshrl.u32 2131351028, %v886
    %v893 = vor.u32 %v891, %v892
    %v894 = vshll.u32 2131351028, %v885
    %v895 = vshrl.u32 2102212464, %v886
    %v896 = vor.u32 %v894, %v895
    %v897 = vshll.u32 2102212464, %v885
    %v898 = vshrl.u32 920167782, %v886
    %v899 = vor.u32 %v897, %v898
    %v900 = vshll.u32 920167782, %v885
    %v901 = vshrl.u32 1326507024, %v886
    %v902 = vor.u32 %v900, %v901
    %vm903 = vcmp.lt.s32.totalorder %v884, 1
    %vm904 = vcmp.lt.s32.totalorder %v884, 2
    %vm905 = vcmp.lt.s32.totalorder %v884, 3
    %vm906 = vcmp.lt.s32.totalorder %v884, 4
    %v907 = vsel %vm903, %v887, %v890
    %v908 = vsel %vm906, %v896, 2102212464
    %v909 = vsel %vm905, %v893, %v908
    %v910 = vsel %vm904, %v907, %v909
    %v911 = vsel %vm903, %v890, %v893
    %v912 = vsel %vm906, %v899, 920167782
    %v913 = vsel %vm905, %v896, %v912
    %v914 = vsel %vm904, %v911, %v913
    %v915 = vsel %vm903, %v893, %v896
    %v916 = vsel %vm906, %v902, 1326507024
    %v917 = vsel %vm905, %v899, %v916
    %v918 = vsel %vm904, %v915, %v917
    %v919 = vshll.u32 %v879, 8
    %v920 = vmul.u32.u64.compose %v919, %v918
    %v921 = vextract.low.u32 %v920
    %v922 = vextract.high.u32 %v920
    %v923 = vmul.u32.u64.compose %v919, %v914
    %v924 = vextract.low.u32 %v923
    %v925 = vextract.high.u32 %v923
    %v926 = vmul.u32 %v919, %v910
    %v927 = vadd.s32 %v922, %v924
    %vm928 = vc.u32 %v922, %v924
    %v929 = vadd.s32 %v925, 1
    %v930 = vsel %vm928, %v929, %v925
    %v931 = vadd.s32 %v926, %v930
    %v932 = vadd.s32 %v931, 536870912
    %v933 = vshrl.u32 %v932, 30
    %v934 = vshll.u32 %v933, 30
    %v935 = vsub.s32 %v931, %v934
    %vm936 = vcmp.lt.s32.totalorder %v935, 0
    %v937 = vsub.s32 0, %v935
    %v938 = vsel %vm936, %v937, %v935
    %v939 = vclz %v938
    %v940 = vsub.s32 %v939, 2
    %vm941 = vcmp.gt.s32.totalorder 0, %v940
    %v942 = vsel %vm941, 0, %v940
    %v943 = vsub.s32 32, %v942
    %v944 = vshll.u32 %v935, %v942
    %v945 = vshrl.u32 %v927, %v943
    %v946 = vor.u32 %v944, %v945
    %v947 = vsub.s32 4294967266, %v942
    %v948 = vadd.s32 %v947, 127
    %v949 = vshll.u32 %v948, 23
    %v950 = vor.u32 4788187, %v949
    %v951 = vand.u32 2147483647, %v950
    %v953 = vcvt.s32.f32 %v946
    %v954 = vmul.f32 %v953, %v951
    %v955 = vxor.u32 %v954, 2147483648
    %v956 = vsel %vm873, %v955, %v954
    %v957 = vsub.s32 4, %v933
    %v958 = vsel %vm873, %v957, %v933
    %v959 = vsel %vm872, %v869, %v956
    %v960 = vsel %vm872, 0, %v958
    %v961 = vcosq.f32.pop %v959
    %v962 = vsinq.f32.pop %v959
    %vm963 = vweird.f32 %v869
    %v964 = vadd.s32 %v960, 3
    %v965 = vand.u32 %v964, 3
    %vm966 = vcmp.lt.s32.totalorder %v965, 2
    %vm967 = vcmp.eq.s32.totalorder %v965, 0
    %v968 = vxor.u32 %v962, 2147483648
    %v969 = vsel %vm967, %v961, %v968
    %vm970 = vcmp.eq.s32.totalorder %v965, 2
    %v971 = vxor.u32 %v961, 2147483648
    %v972 = vsel %vm970, %v971, %v962
    %v973 = vsel %vm966, %v969, %v972
    %v974 = vsel %vm963, nan, %v973
    %v975 = vand.u32 2147483647, %v870
    %vm976 = vcmp.le.f32.partialorder %v975, 0.7853982
    %vm977 = vcmp.lt.s32.totalorder %v870, 0
    %v978 = vand.u32 %v870, 2139095040
    %v979 = vshrl.u32 %v978, 23
    %v980 = vsub.s32 %v979, 127
    %v981 = vand.u32 2147483647, %v870
    %v982 = vand.u32 %v981, 8388607
    %v983 = vor.u32 %v982, 8388608
    %v984 = vsub.s32 0, %v983
    %v985 = vadd.s32 %v980, 1
    %vm986 = vcmp.gt.s32.totalorder %v985, 0
    %v987 = vsel %vm986, %v985, 0
    %v988 = vshrl.u32 %v987, 5
    %v989 = vand.u32 %v987, 31
    %v990 = vsub.s32 32, %v989
    %v991 = vshrl.u32 683565275, %v990
    %v992 = vshll.u32 683565275, %v989
    %v993 = vshrl.u32 2475754826, %v990
    %v994 = vor.u32 %v992, %v993
    %v995 = vshll.u32 2475754826, %v989
    %v996 = vshrl.u32 2131351028, %v990
    %v997 = vor.u32 %v995, %v996
    %v998 = vshll.u32 2131351028, %v989
    %v999 = vshrl.u32 2102212464, %v990
    %v1000 = vor.u32 %v998, %v999
    %v1001 = vshll.u32 2102212464, %v989
    %v1002 = vshrl.u32 920167782, %v990
    %v1003 = vor.u32 %v1001, %v1002
    %v1004 = vshll.u32 920167782, %v989
    %v1005 = vshrl.u32 1326507024, %v990
    %v1006 = vor.u32 %v1004, %v1005
    %vm1007 = vcmp.lt.s32.totalorder %v988, 1
    %vm1008 = vcmp.lt.s32.totalorder %v988, 2
    %vm1009 = vcmp.lt.s32.totalorder %v988, 3
    %vm1010 = vcmp.lt.s32.totalorder %v988, 4
    %v1011 = vsel %vm1007, %v991, %v994
    %v1012 = vsel %vm1010, %v1000, 2102212464
    %v1013 = vsel %vm1009, %v997, %v1012
    %v1014 = vsel %vm1008, %v1011, %v1013
    %v1015 = vsel %vm1007, %v994, %v997
    %v1016 = vsel %vm1010, %v1003, 920167782
    %v1017 = vsel %vm1009, %v1000, %v1016
    %v1018 = vsel %vm1008, %v1015, %v1017
    %v1019 = vsel %vm1007, %v997, %v1000
    %v1020 = vsel %vm1010, %v1006, 1326507024
    %v1021 = vsel %vm1009, %v1003, %v1020
    %v1022 = vsel %vm1008, %v1019, %v1021
    %v1023 = vshll.u32 %v983, 8
    %v1024 = vmul.u32.u64.compose %v1023, %v1022
    %v1025 = vextract.low.u32 %v1024
    %v1026 = vextract.high.u32 %v1024
    %v1027 = vmul.u32.u64.compose %v1023, %v1018
    %v1028 = vextract.low.u32 %v1027
    %v1029 = vextract.high.u32 %v1027
    %v1030 = vmul.u32 %v1023, %v1014
    %v1031 = vadd.s32 %v1026, %v1028
    %vm1032 = vc.u32 %v1026, %v1028
    %v1033 = vadd.s32 %v1029, 1
    %v1034 = vsel %vm1032, %v1033, %v1029
    %v1035 = vadd.s32 %v1030, %v1034
    %v1036 = vadd.s32 %v1035, 536870912
    %v1037 = vshrl.u32 %v1036, 30
    %v1038 = vshll.u32 %v1037, 30
    %v1039 = vsub.s32 %v1035, %v1038
    %vm1040 = vcmp.lt.s32.totalorder %v1039, 0
    %v1041 = vsub.s32 0, %v1039
    %v1042 = vsel %vm1040, %v1041, %v1039
    %v1043 = vclz %v1042
    %v1044 = vsub.s32 %v1043, 2
    %vm1045 = vcmp.gt.s32.totalorder 0, %v1044
    %v1046 = vsel %vm1045, 0, %v1044
    %v1047 = vsub.s32 32, %v1046
    %v1048 = vshll.u32 %v1039, %v1046
    %v1049 = vshrl.u32 %v1031, %v1047
    %v1050 = vor.u32 %v1048, %v1049
    %v1051 = vsub.s32 4294967266, %v1046
    %v1052 = vadd.s32 %v1051, 127
    %v1053 = vshll.u32 %v1052, 23
    %v1054 = vor.u32 4788187, %v1053
    %v1055 = vand.u32 2147483647, %v1054
    %v1057 = vcvt.s32.f32 %v1050
    %v1058 = vmul.f32 %v1057, %v1055
    %v1059 = vxor.u32 %v1058, 2147483648
    %v1060 = vsel %vm977, %v1059, %v1058
    %v1061 = vsub.s32 4, %v1037
    %v1062 = vsel %vm977, %v1061, %v1037
    %v1063 = vsel %vm976, %v870, %v1060
    %v1064 = vsel %vm976, 0, %v1062
    %v1065 = vcosq.f32.pop %v1063
    %v1066 = vsinq.f32.pop %v1063
    %vm1067 = vweird.f32 %v870
    %v1068 = vadd.s32 %v1064, 3
    %v1069 = vand.u32 %v1068, 3
    %vm1070 = vcmp.lt.s32.totalorder %v1069, 2
    %vm1071 = vcmp.eq.s32.totalorder %v1069, 0
    %v1072 = vxor.u32 %v1066, 2147483648
    %v1073 = vsel %vm1071, %v1065, %v1072
    %vm1074 = vcmp.eq.s32.totalorder %v1069, 2
    %v1075 = vxor.u32 %v1065, 2147483648
    %v1076 = vsel %vm1074, %v1075, %v1066
    %v1077 = vsel %vm1070, %v1073, %v1076
    %v1078 = vsel %vm1067, nan, %v1077
    %s1079 = scalar_lea.vmem [#allocation5], 80
    %1080 = vst [vmem:[%s1079] sm:$0xff] %v974
    %1081 = vst [vmem:[%s1079 + $0x8] sm:$0xff] %v1078
    %v1082 = vand.u32 2147483647, %v869
    %vm1083 = vcmp.le.f32.partialorder %v1082, 0.7853982
    %vm1084 = vcmp.lt.s32.totalorder %v869, 0
    %v1085 = vand.u32 %v869, 2139095040
    %v1086 = vshrl.u32 %v1085, 23
    %v1087 = vsub.s32 %v1086, 127
    %v1088 = vand.u32 2147483647, %v869
    %v1089 = vand.u32 %v1088, 8388607
    %v1090 = vor.u32 %v1089, 8388608
    %v1091 = vsub.s32 0, %v1090
    %v1092 = vadd.s32 %v1087, 1
    %vm1093 = vcmp.gt.s32.totalorder %v1092, 0
    %v1094 = vsel %vm1093, %v1092, 0
    %v1095 = vshrl.u32 %v1094, 5
    %v1096 = vand.u32 %v1094, 31
    %v1097 = vsub.s32 32, %v1096
    %v1098 = vshrl.u32 683565275, %v1097
    %v1099 = vshll.u32 683565275, %v1096
    %v1100 = vshrl.u32 2475754826, %v1097
    %v1101 = vor.u32 %v1099, %v1100
    %v1102 = vshll.u32 2475754826, %v1096
    %v1103 = vshrl.u32 2131351028, %v1097
    %v1104 = vor.u32 %v1102, %v1103
    %v1105 = vshll.u32 2131351028, %v1096
    %v1106 = vshrl.u32 2102212464, %v1097
    %v1107 = vor.u32 %v1105, %v1106
    %v1108 = vshll.u32 2102212464, %v1096
    %v1109 = vshrl.u32 920167782, %v1097
    %v1110 = vor.u32 %v1108, %v1109
    %v1111 = vshll.u32 920167782, %v1096
    %v1112 = vshrl.u32 1326507024, %v1097
    %v1113 = vor.u32 %v1111, %v1112
    %vm1114 = vcmp.lt.s32.totalorder %v1095, 1
    %vm1115 = vcmp.lt.s32.totalorder %v1095, 2
    %vm1116 = vcmp.lt.s32.totalorder %v1095, 3
    %vm1117 = vcmp.lt.s32.totalorder %v1095, 4
    %v1118 = vsel %vm1114, %v1098, %v1101
    %v1119 = vsel %vm1117, %v1107, 2102212464
    %v1120 = vsel %vm1116, %v1104, %v1119
    %v1121 = vsel %vm1115, %v1118, %v1120
    %v1122 = vsel %vm1114, %v1101, %v1104
    %v1123 = vsel %vm1117, %v1110, 920167782
    %v1124 = vsel %vm1116, %v1107, %v1123
    %v1125 = vsel %vm1115, %v1122, %v1124
    %v1126 = vsel %vm1114, %v1104, %v1107
    %v1127 = vsel %vm1117, %v1113, 1326507024
    %v1128 = vsel %vm1116, %v1110, %v1127
    %v1129 = vsel %vm1115, %v1126, %v1128
    %v1130 = vshll.u32 %v1090, 8
    %v1131 = vmul.u32.u64.compose %v1130, %v1129
    %v1132 = vextract.low.u32 %v1131
    %v1133 = vextract.high.u32 %v1131
    %v1134 = vmul.u32.u64.compose %v1130, %v1125
    %v1135 = vextract.low.u32 %v1134
    %v1136 = vextract.high.u32 %v1134
    %v1137 = vmul.u32 %v1130, %v1121
    %v1138 = vadd.s32 %v1133, %v1135
    %vm1139 = vc.u32 %v1133, %v1135
    %v1140 = vadd.s32 %v1136, 1
    %v1141 = vsel %vm1139, %v1140, %v1136
    %v1142 = vadd.s32 %v1137, %v1141
    %v1143 = vadd.s32 %v1142, 536870912
    %v1144 = vshrl.u32 %v1143, 30
    %v1145 = vshll.u32 %v1144, 30
    %v1146 = vsub.s32 %v1142, %v1145
    %vm1147 = vcmp.lt.s32.totalorder %v1146, 0
    %v1148 = vsub.s32 0, %v1146
    %v1149 = vsel %vm1147, %v1148, %v1146
    %v1150 = vclz %v1149
    %v1151 = vsub.s32 %v1150, 2
    %vm1152 = vcmp.gt.s32.totalorder 0, %v1151
    %v1153 = vsel %vm1152, 0, %v1151
    %v1154 = vsub.s32 32, %v1153
    %v1155 = vshll.u32 %v1146, %v1153
    %v1156 = vshrl.u32 %v1138, %v1154
    %v1157 = vor.u32 %v1155, %v1156
    %v1158 = vsub.s32 4294967266, %v1153
    %v1159 = vadd.s32 %v1158, 127
    %v1160 = vshll.u32 %v1159, 23
    %v1161 = vor.u32 4788187, %v1160
    %v1162 = vand.u32 2147483647, %v1161
    %v1164 = vcvt.s32.f32 %v1157
    %v1165 = vmul.f32 %v1164, %v1162
    %v1166 = vxor.u32 %v1165, 2147483648
    %v1167 = vsel %vm1084, %v1166, %v1165
    %v1168 = vsub.s32 4, %v1144
    %v1169 = vsel %vm1084, %v1168, %v1144
    %v1170 = vsel %vm1083, %v869, %v1167
    %v1171 = vsel %vm1083, 0, %v1169
    %v1172 = vcosq.f32.pop %v1170
    %v1173 = vsinq.f32.pop %v1170
    %vm1174 = vweird.f32 %v869
    %v1175 = vand.u32 %v1171, 3
    %vm1176 = vcmp.lt.s32.totalorder %v1175, 2
    %vm1177 = vcmp.eq.s32.totalorder %v1175, 0
    %v1178 = vxor.u32 %v1173, 2147483648
    %v1179 = vsel %vm1177, %v1172, %v1178
    %vm1180 = vcmp.eq.s32.totalorder %v1175, 2
    %v1181 = vxor.u32 %v1172, 2147483648
    %v1182 = vsel %vm1180, %v1181, %v1173
    %v1183 = vsel %vm1176, %v1179, %v1182
    %v1184 = vsel %vm1174, nan, %v1183
    %v1185 = vand.u32 2147483647, %v870
    %vm1186 = vcmp.le.f32.partialorder %v1185, 0.7853982
    %vm1187 = vcmp.lt.s32.totalorder %v870, 0
    %v1188 = vand.u32 %v870, 2139095040
    %v1189 = vshrl.u32 %v1188, 23
    %v1190 = vsub.s32 %v1189, 127
    %v1191 = vand.u32 2147483647, %v870
    %v1192 = vand.u32 %v1191, 8388607
    %v1193 = vor.u32 %v1192, 8388608
    %v1194 = vsub.s32 0, %v1193
    %v1195 = vadd.s32 %v1190, 1
    %vm1196 = vcmp.gt.s32.totalorder %v1195, 0
    %v1197 = vsel %vm1196, %v1195, 0
    %v1198 = vshrl.u32 %v1197, 5
    %v1199 = vand.u32 %v1197, 31
    %v1200 = vsub.s32 32, %v1199
    %v1201 = vshrl.u32 683565275, %v1200
    %v1202 = vshll.u32 683565275, %v1199
    %v1203 = vshrl.u32 2475754826, %v1200
    %v1204 = vor.u32 %v1202, %v1203
    %v1205 = vshll.u32 2475754826, %v1199
    %v1206 = vshrl.u32 2131351028, %v1200
    %v1207 = vor.u32 %v1205, %v1206
    %v1208 = vshll.u32 2131351028, %v1199
    %v1209 = vshrl.u32 2102212464, %v1200
    %v1210 = vor.u32 %v1208, %v1209
    %v1211 = vshll.u32 2102212464, %v1199
    %v1212 = vshrl.u32 920167782, %v1200
    %v1213 = vor.u32 %v1211, %v1212
    %v1214 = vshll.u32 920167782, %v1199
    %v1215 = vshrl.u32 1326507024, %v1200
    %v1216 = vor.u32 %v1214, %v1215
    %vm1217 = vcmp.lt.s32.totalorder %v1198, 1
    %vm1218 = vcmp.lt.s32.totalorder %v1198, 2
    %vm1219 = vcmp.lt.s32.totalorder %v1198, 3
    %vm1220 = vcmp.lt.s32.totalorder %v1198, 4
    %v1221 = vsel %vm1217, %v1201, %v1204
    %v1222 = vsel %vm1220, %v1210, 2102212464
    %v1223 = vsel %vm1219, %v1207, %v1222
    %v1224 = vsel %vm1218, %v1221, %v1223
    %v1225 = vsel %vm1217, %v1204, %v1207
    %v1226 = vsel %vm1220, %v1213, 920167782
    %v1227 = vsel %vm1219, %v1210, %v1226
    %v1228 = vsel %vm1218, %v1225, %v1227
    %v1229 = vsel %vm1217, %v1207, %v1210
    %v1230 = vsel %vm1220, %v1216, 1326507024
    %v1231 = vsel %vm1219, %v1213, %v1230
    %v1232 = vsel %vm1218, %v1229, %v1231
    %v1233 = vshll.u32 %v1193, 8
    %v1234 = vmul.u32.u64.compose %v1233, %v1232
    %v1235 = vextract.low.u32 %v1234
    %v1236 = vextract.high.u32 %v1234
    %v1237 = vmul.u32.u64.compose %v1233, %v1228
    %v1238 = vextract.low.u32 %v1237
    %v1239 = vextract.high.u32 %v1237
    %v1240 = vmul.u32 %v1233, %v1224
    %v1241 = vadd.s32 %v1236, %v1238
    %vm1242 = vc.u32 %v1236, %v1238
    %v1243 = vadd.s32 %v1239, 1
    %v1244 = vsel %vm1242, %v1243, %v1239
    %v1245 = vadd.s32 %v1240, %v1244
    %v1246 = vadd.s32 %v1245, 536870912
    %v1247 = vshrl.u32 %v1246, 30
    %v1248 = vshll.u32 %v1247, 30
    %v1249 = vsub.s32 %v1245, %v1248
    %vm1250 = vcmp.lt.s32.totalorder %v1249, 0
    %v1251 = vsub.s32 0, %v1249
    %v1252 = vsel %vm1250, %v1251, %v1249
    %v1253 = vclz %v1252
    %v1254 = vsub.s32 %v1253, 2
    %vm1255 = vcmp.gt.s32.totalorder 0, %v1254
    %v1256 = vsel %vm1255, 0, %v1254
    %v1257 = vsub.s32 32, %v1256
    %v1258 = vshll.u32 %v1249, %v1256
    %v1259 = vshrl.u32 %v1241, %v1257
    %v1260 = vor.u32 %v1258, %v1259
    %v1261 = vsub.s32 4294967266, %v1256
    %v1262 = vadd.s32 %v1261, 127
    %v1263 = vshll.u32 %v1262, 23
    %v1264 = vor.u32 4788187, %v1263
    %v1265 = vand.u32 2147483647, %v1264
    %v1267 = vcvt.s32.f32 %v1260
    %v1268 = vmul.f32 %v1267, %v1265
    %v1269 = vxor.u32 %v1268, 2147483648
    %v1270 = vsel %vm1187, %v1269, %v1268
    %v1271 = vsub.s32 4, %v1247
    %v1272 = vsel %vm1187, %v1271, %v1247
    %v1273 = vsel %vm1186, %v870, %v1270
    %v1274 = vsel %vm1186, 0, %v1272
    %v1275 = vcosq.f32.pop %v1273
    %v1276 = vsinq.f32.pop %v1273
    %vm1277 = vweird.f32 %v870
    %v1278 = vand.u32 %v1274, 3
    %vm1279 = vcmp.lt.s32.totalorder %v1278, 2
    %vm1280 = vcmp.eq.s32.totalorder %v1278, 0
    %v1281 = vxor.u32 %v1276, 2147483648
    %v1282 = vsel %vm1280, %v1275, %v1281
    %vm1283 = vcmp.eq.s32.totalorder %v1278, 2
    %v1284 = vxor.u32 %v1275, 2147483648
    %v1285 = vsel %vm1283, %v1284, %v1276
    %v1286 = vsel %vm1279, %v1282, %v1285
    %v1287 = vsel %vm1277, nan, %v1286
    %s1288 = scalar_lea.vmem [#allocation5], 96
    %1289 = vst [vmem:[%s1288] sm:$0xff] %v1184
    %1290 = vst [vmem:[%s1288 + $0x8] sm:$0xff] %v1287
    %v1291 = vmul.f32 %v23, 8.0
    %v1292 = vmul.f32 %v24, 8.0
    %v1293 = vand.u32 2147483647, %v1291
    %vm1294 = vcmp.le.f32.partialorder %v1293, 0.7853982
    %vm1295 = vcmp.lt.s32.totalorder %v1291, 0
    %v1296 = vand.u32 %v1291, 2139095040
    %v1297 = vshrl.u32 %v1296, 23
    %v1298 = vsub.s32 %v1297, 127
    %v1299 = vand.u32 2147483647, %v1291
    %v1300 = vand.u32 %v1299, 8388607
    %v1301 = vor.u32 %v1300, 8388608
    %v1302 = vsub.s32 0, %v1301
    %v1303 = vadd.s32 %v1298, 1
    %vm1304 = vcmp.gt.s32.totalorder %v1303, 0
    %v1305 = vsel %vm1304, %v1303, 0
    %v1306 = vshrl.u32 %v1305, 5
    %v1307 = vand.u32 %v1305, 31
    %v1308 = vsub.s32 32, %v1307
    %v1309 = vshrl.u32 683565275, %v1308
    %v1310 = vshll.u32 683565275, %v1307
    %v1311 = vshrl.u32 2475754826, %v1308
    %v1312 = vor.u32 %v1310, %v1311
    %v1313 = vshll.u32 2475754826, %v1307
    %v1314 = vshrl.u32 2131351028, %v1308
    %v1315 = vor.u32 %v1313, %v1314
    %v1316 = vshll.u32 2131351028, %v1307
    %v1317 = vshrl.u32 2102212464, %v1308
    %v1318 = vor.u32 %v1316, %v1317
    %v1319 = vshll.u32 2102212464, %v1307
    %v1320 = vshrl.u32 920167782, %v1308
    %v1321 = vor.u32 %v1319, %v1320
    %v1322 = vshll.u32 920167782, %v1307
    %v1323 = vshrl.u32 1326507024, %v1308
    %v1324 = vor.u32 %v1322, %v1323
    %vm1325 = vcmp.lt.s32.totalorder %v1306, 1
    %vm1326 = vcmp.lt.s32.totalorder %v1306, 2
    %vm1327 = vcmp.lt.s32.totalorder %v1306, 3
    %vm1328 = vcmp.lt.s32.totalorder %v1306, 4
    %v1329 = vsel %vm1325, %v1309, %v1312
    %v1330 = vsel %vm1328, %v1318, 2102212464
    %v1331 = vsel %vm1327, %v1315, %v1330
    %v1332 = vsel %vm1326, %v1329, %v1331
    %v1333 = vsel %vm1325, %v1312, %v1315
    %v1334 = vsel %vm1328, %v1321, 920167782
    %v1335 = vsel %vm1327, %v1318, %v1334
    %v1336 = vsel %vm1326, %v1333, %v1335
    %v1337 = vsel %vm1325, %v1315, %v1318
    %v1338 = vsel %vm1328, %v1324, 1326507024
    %v1339 = vsel %vm1327, %v1321, %v1338
    %v1340 = vsel %vm1326, %v1337, %v1339
    %v1341 = vshll.u32 %v1301, 8
    %v1342 = vmul.u32.u64.compose %v1341, %v1340
    %v1343 = vextract.low.u32 %v1342
    %v1344 = vextract.high.u32 %v1342
    %v1345 = vmul.u32.u64.compose %v1341, %v1336
    %v1346 = vextract.low.u32 %v1345
    %v1347 = vextract.high.u32 %v1345
    %v1348 = vmul.u32 %v1341, %v1332
    %v1349 = vadd.s32 %v1344, %v1346
    %vm1350 = vc.u32 %v1344, %v1346
    %v1351 = vadd.s32 %v1347, 1
    %v1352 = vsel %vm1350, %v1351, %v1347
    %v1353 = vadd.s32 %v1348, %v1352
    %v1354 = vadd.s32 %v1353, 536870912
    %v1355 = vshrl.u32 %v1354, 30
    %v1356 = vshll.u32 %v1355, 30
    %v1357 = vsub.s32 %v1353, %v1356
    %vm1358 = vcmp.lt.s32.totalorder %v1357, 0
    %v1359 = vsub.s32 0, %v1357
    %v1360 = vsel %vm1358, %v1359, %v1357
    %v1361 = vclz %v1360
    %v1362 = vsub.s32 %v1361, 2
    %vm1363 = vcmp.gt.s32.totalorder 0, %v1362
    %v1364 = vsel %vm1363, 0, %v1362
    %v1365 = vsub.s32 32, %v1364
    %v1366 = vshll.u32 %v1357, %v1364
    %v1367 = vshrl.u32 %v1349, %v1365
    %v1368 = vor.u32 %v1366, %v1367
    %v1369 = vsub.s32 4294967266, %v1364
    %v1370 = vadd.s32 %v1369, 127
    %v1371 = vshll.u32 %v1370, 23
    %v1372 = vor.u32 4788187, %v1371
    %v1373 = vand.u32 2147483647, %v1372
    %v1375 = vcvt.s32.f32 %v1368
    %v1376 = vmul.f32 %v1375, %v1373
    %v1377 = vxor.u32 %v1376, 2147483648
    %v1378 = vsel %vm1295, %v1377, %v1376
    %v1379 = vsub.s32 4, %v1355
    %v1380 = vsel %vm1295, %v1379, %v1355
    %v1381 = vsel %vm1294, %v1291, %v1378
    %v1382 = vsel %vm1294, 0, %v1380
    %v1383 = vcosq.f32.pop %v1381
    %v1384 = vsinq.f32.pop %v1381
    %vm1385 = vweird.f32 %v1291
    %v1386 = vadd.s32 %v1382, 3
    %v1387 = vand.u32 %v1386, 3
    %vm1388 = vcmp.lt.s32.totalorder %v1387, 2
    %vm1389 = vcmp.eq.s32.totalorder %v1387, 0
    %v1390 = vxor.u32 %v1384, 2147483648
    %v1391 = vsel %vm1389, %v1383, %v1390
    %vm1392 = vcmp.eq.s32.totalorder %v1387, 2
    %v1393 = vxor.u32 %v1383, 2147483648
    %v1394 = vsel %vm1392, %v1393, %v1384
    %v1395 = vsel %vm1388, %v1391, %v1394
    %v1396 = vsel %vm1385, nan, %v1395
    %v1397 = vand.u32 2147483647, %v1292
    %vm1398 = vcmp.le.f32.partialorder %v1397, 0.7853982
    %vm1399 = vcmp.lt.s32.totalorder %v1292, 0
    %v1400 = vand.u32 %v1292, 2139095040
    %v1401 = vshrl.u32 %v1400, 23
    %v1402 = vsub.s32 %v1401, 127
    %v1403 = vand.u32 2147483647, %v1292
    %v1404 = vand.u32 %v1403, 8388607
    %v1405 = vor.u32 %v1404, 8388608
    %v1406 = vsub.s32 0, %v1405
    %v1407 = vadd.s32 %v1402, 1
    %vm1408 = vcmp.gt.s32.totalorder %v1407, 0
    %v1409 = vsel %vm1408, %v1407, 0
    %v1410 = vshrl.u32 %v1409, 5
    %v1411 = vand.u32 %v1409, 31
    %v1412 = vsub.s32 32, %v1411
    %v1413 = vshrl.u32 683565275, %v1412
    %v1414 = vshll.u32 683565275, %v1411
    %v1415 = vshrl.u32 2475754826, %v1412
    %v1416 = vor.u32 %v1414, %v1415
    %v1417 = vshll.u32 2475754826, %v1411
    %v1418 = vshrl.u32 2131351028, %v1412
    %v1419 = vor.u32 %v1417, %v1418
    %v1420 = vshll.u32 2131351028, %v1411
    %v1421 = vshrl.u32 2102212464, %v1412
    %v1422 = vor.u32 %v1420, %v1421
    %v1423 = vshll.u32 2102212464, %v1411
    %v1424 = vshrl.u32 920167782, %v1412
    %v1425 = vor.u32 %v1423, %v1424
    %v1426 = vshll.u32 920167782, %v1411
    %v1427 = vshrl.u32 1326507024, %v1412
    %v1428 = vor.u32 %v1426, %v1427
    %vm1429 = vcmp.lt.s32.totalorder %v1410, 1
    %vm1430 = vcmp.lt.s32.totalorder %v1410, 2
    %vm1431 = vcmp.lt.s32.totalorder %v1410, 3
    %vm1432 = vcmp.lt.s32.totalorder %v1410, 4
    %v1433 = vsel %vm1429, %v1413, %v1416
    %v1434 = vsel %vm1432, %v1422, 2102212464
    %v1435 = vsel %vm1431, %v1419, %v1434
    %v1436 = vsel %vm1430, %v1433, %v1435
    %v1437 = vsel %vm1429, %v1416, %v1419
    %v1438 = vsel %vm1432, %v1425, 920167782
    %v1439 = vsel %vm1431, %v1422, %v1438
    %v1440 = vsel %vm1430, %v1437, %v1439
    %v1441 = vsel %vm1429, %v1419, %v1422
    %v1442 = vsel %vm1432, %v1428, 1326507024
    %v1443 = vsel %vm1431, %v1425, %v1442
    %v1444 = vsel %vm1430, %v1441, %v1443
    %v1445 = vshll.u32 %v1405, 8
    %v1446 = vmul.u32.u64.compose %v1445, %v1444
    %v1447 = vextract.low.u32 %v1446
    %v1448 = vextract.high.u32 %v1446
    %v1449 = vmul.u32.u64.compose %v1445, %v1440
    %v1450 = vextract.low.u32 %v1449
    %v1451 = vextract.high.u32 %v1449
    %v1452 = vmul.u32 %v1445, %v1436
    %v1453 = vadd.s32 %v1448, %v1450
    %vm1454 = vc.u32 %v1448, %v1450
    %v1455 = vadd.s32 %v1451, 1
    %v1456 = vsel %vm1454, %v1455, %v1451
    %v1457 = vadd.s32 %v1452, %v1456
    %v1458 = vadd.s32 %v1457, 536870912
    %v1459 = vshrl.u32 %v1458, 30
    %v1460 = vshll.u32 %v1459, 30
    %v1461 = vsub.s32 %v1457, %v1460
    %vm1462 = vcmp.lt.s32.totalorder %v1461, 0
    %v1463 = vsub.s32 0, %v1461
    %v1464 = vsel %vm1462, %v1463, %v1461
    %v1465 = vclz %v1464
    %v1466 = vsub.s32 %v1465, 2
    %vm1467 = vcmp.gt.s32.totalorder 0, %v1466
    %v1468 = vsel %vm1467, 0, %v1466
    %v1469 = vsub.s32 32, %v1468
    %v1470 = vshll.u32 %v1461, %v1468
    %v1471 = vshrl.u32 %v1453, %v1469
    %v1472 = vor.u32 %v1470, %v1471
    %v1473 = vsub.s32 4294967266, %v1468
    %v1474 = vadd.s32 %v1473, 127
    %v1475 = vshll.u32 %v1474, 23
    %v1476 = vor.u32 4788187, %v1475
    %v1477 = vand.u32 2147483647, %v1476
    %v1479 = vcvt.s32.f32 %v1472
    %v1480 = vmul.f32 %v1479, %v1477
    %v1481 = vxor.u32 %v1480, 2147483648
    %v1482 = vsel %vm1399, %v1481, %v1480
    %v1483 = vsub.s32 4, %v1459
    %v1484 = vsel %vm1399, %v1483, %v1459
    %v1485 = vsel %vm1398, %v1292, %v1482
    %v1486 = vsel %vm1398, 0, %v1484
    %v1487 = vcosq.f32.pop %v1485
    %v1488 = vsinq.f32.pop %v1485
    %vm1489 = vweird.f32 %v1292
    %v1490 = vadd.s32 %v1486, 3
    %v1491 = vand.u32 %v1490, 3
    %vm1492 = vcmp.lt.s32.totalorder %v1491, 2
    %vm1493 = vcmp.eq.s32.totalorder %v1491, 0
    %v1494 = vxor.u32 %v1488, 2147483648
    %v1495 = vsel %vm1493, %v1487, %v1494
    %vm1496 = vcmp.eq.s32.totalorder %v1491, 2
    %v1497 = vxor.u32 %v1487, 2147483648
    %v1498 = vsel %vm1496, %v1497, %v1488
    %v1499 = vsel %vm1492, %v1495, %v1498
    %v1500 = vsel %vm1489, nan, %v1499
    %s1501 = scalar_lea.vmem [#allocation5], 112
    %1502 = vst [vmem:[%s1501] sm:$0xff] %v1396
    %1503 = vst [vmem:[%s1501 + $0x8] sm:$0xff] %v1500
    %v1504 = vand.u32 2147483647, %v1291
    %vm1505 = vcmp.le.f32.partialorder %v1504, 0.7853982
    %vm1506 = vcmp.lt.s32.totalorder %v1291, 0
    %v1507 = vand.u32 %v1291, 2139095040
    %v1508 = vshrl.u32 %v1507, 23
    %v1509 = vsub.s32 %v1508, 127
    %v1510 = vand.u32 2147483647, %v1291
    %v1511 = vand.u32 %v1510, 8388607
    %v1512 = vor.u32 %v1511, 8388608
    %v1513 = vsub.s32 0, %v1512
    %v1514 = vadd.s32 %v1509, 1
    %vm1515 = vcmp.gt.s32.totalorder %v1514, 0
    %v1516 = vsel %vm1515, %v1514, 0
    %v1517 = vshrl.u32 %v1516, 5
    %v1518 = vand.u32 %v1516, 31
    %v1519 = vsub.s32 32, %v1518
    %v1520 = vshrl.u32 683565275, %v1519
    %v1521 = vshll.u32 683565275, %v1518
    %v1522 = vshrl.u32 2475754826, %v1519
    %v1523 = vor.u32 %v1521, %v1522
    %v1524 = vshll.u32 2475754826, %v1518
    %v1525 = vshrl.u32 2131351028, %v1519
    %v1526 = vor.u32 %v1524, %v1525
    %v1527 = vshll.u32 2131351028, %v1518
    %v1528 = vshrl.u32 2102212464, %v1519
    %v1529 = vor.u32 %v1527, %v1528
    %v1530 = vshll.u32 2102212464, %v1518
    %v1531 = vshrl.u32 920167782, %v1519
    %v1532 = vor.u32 %v1530, %v1531
    %v1533 = vshll.u32 920167782, %v1518
    %v1534 = vshrl.u32 1326507024, %v1519
    %v1535 = vor.u32 %v1533, %v1534
    %vm1536 = vcmp.lt.s32.totalorder %v1517, 1
    %vm1537 = vcmp.lt.s32.totalorder %v1517, 2
    %vm1538 = vcmp.lt.s32.totalorder %v1517, 3
    %vm1539 = vcmp.lt.s32.totalorder %v1517, 4
    %v1540 = vsel %vm1536, %v1520, %v1523
    %v1541 = vsel %vm1539, %v1529, 2102212464
    %v1542 = vsel %vm1538, %v1526, %v1541
    %v1543 = vsel %vm1537, %v1540, %v1542
    %v1544 = vsel %vm1536, %v1523, %v1526
    %v1545 = vsel %vm1539, %v1532, 920167782
    %v1546 = vsel %vm1538, %v1529, %v1545
    %v1547 = vsel %vm1537, %v1544, %v1546
    %v1548 = vsel %vm1536, %v1526, %v1529
    %v1549 = vsel %vm1539, %v1535, 1326507024
    %v1550 = vsel %vm1538, %v1532, %v1549
    %v1551 = vsel %vm1537, %v1548, %v1550
    %v1552 = vshll.u32 %v1512, 8
    %v1553 = vmul.u32.u64.compose %v1552, %v1551
    %v1554 = vextract.low.u32 %v1553
    %v1555 = vextract.high.u32 %v1553
    %v1556 = vmul.u32.u64.compose %v1552, %v1547
    %v1557 = vextract.low.u32 %v1556
    %v1558 = vextract.high.u32 %v1556
    %v1559 = vmul.u32 %v1552, %v1543
    %v1560 = vadd.s32 %v1555, %v1557
    %vm1561 = vc.u32 %v1555, %v1557
    %v1562 = vadd.s32 %v1558, 1
    %v1563 = vsel %vm1561, %v1562, %v1558
    %v1564 = vadd.s32 %v1559, %v1563
    %v1565 = vadd.s32 %v1564, 536870912
    %v1566 = vshrl.u32 %v1565, 30
    %v1567 = vshll.u32 %v1566, 30
    %v1568 = vsub.s32 %v1564, %v1567
    %vm1569 = vcmp.lt.s32.totalorder %v1568, 0
    %v1570 = vsub.s32 0, %v1568
    %v1571 = vsel %vm1569, %v1570, %v1568
    %v1572 = vclz %v1571
    %v1573 = vsub.s32 %v1572, 2
    %vm1574 = vcmp.gt.s32.totalorder 0, %v1573
    %v1575 = vsel %vm1574, 0, %v1573
    %v1576 = vsub.s32 32, %v1575
    %v1577 = vshll.u32 %v1568, %v1575
    %v1578 = vshrl.u32 %v1560, %v1576
    %v1579 = vor.u32 %v1577, %v1578
    %v1580 = vsub.s32 4294967266, %v1575
    %v1581 = vadd.s32 %v1580, 127
    %v1582 = vshll.u32 %v1581, 23
    %v1583 = vor.u32 4788187, %v1582
    %v1584 = vand.u32 2147483647, %v1583
    %v1586 = vcvt.s32.f32 %v1579
    %v1587 = vmul.f32 %v1586, %v1584
    %v1588 = vxor.u32 %v1587, 2147483648
    %v1589 = vsel %vm1506, %v1588, %v1587
    %v1590 = vsub.s32 4, %v1566
    %v1591 = vsel %vm1506, %v1590, %v1566
    %v1592 = vsel %vm1505, %v1291, %v1589
    %v1593 = vsel %vm1505, 0, %v1591
    %v1594 = vcosq.f32.pop %v1592
    %v1595 = vsinq.f32.pop %v1592
    %vm1596 = vweird.f32 %v1291
    %v1597 = vand.u32 %v1593, 3
    %vm1598 = vcmp.lt.s32.totalorder %v1597, 2
    %vm1599 = vcmp.eq.s32.totalorder %v1597, 0
    %v1600 = vxor.u32 %v1595, 2147483648
    %v1601 = vsel %vm1599, %v1594, %v1600
    %vm1602 = vcmp.eq.s32.totalorder %v1597, 2
    %v1603 = vxor.u32 %v1594, 2147483648
    %v1604 = vsel %vm1602, %v1603, %v1595
    %v1605 = vsel %vm1598, %v1601, %v1604
    %v1606 = vsel %vm1596, nan, %v1605
    %v1607 = vand.u32 2147483647, %v1292
    %vm1608 = vcmp.le.f32.partialorder %v1607, 0.7853982
    %vm1609 = vcmp.lt.s32.totalorder %v1292, 0
    %v1610 = vand.u32 %v1292, 2139095040
    %v1611 = vshrl.u32 %v1610, 23
    %v1612 = vsub.s32 %v1611, 127
    %v1613 = vand.u32 2147483647, %v1292
    %v1614 = vand.u32 %v1613, 8388607
    %v1615 = vor.u32 %v1614, 8388608
    %v1616 = vsub.s32 0, %v1615
    %v1617 = vadd.s32 %v1612, 1
    %vm1618 = vcmp.gt.s32.totalorder %v1617, 0
    %v1619 = vsel %vm1618, %v1617, 0
    %v1620 = vshrl.u32 %v1619, 5
    %v1621 = vand.u32 %v1619, 31
    %v1622 = vsub.s32 32, %v1621
    %v1623 = vshrl.u32 683565275, %v1622
    %v1624 = vshll.u32 683565275, %v1621
    %v1625 = vshrl.u32 2475754826, %v1622
    %v1626 = vor.u32 %v1624, %v1625
    %v1627 = vshll.u32 2475754826, %v1621
    %v1628 = vshrl.u32 2131351028, %v1622
    %v1629 = vor.u32 %v1627, %v1628
    %v1630 = vshll.u32 2131351028, %v1621
    %v1631 = vshrl.u32 2102212464, %v1622
    %v1632 = vor.u32 %v1630, %v1631
    %v1633 = vshll.u32 2102212464, %v1621
    %v1634 = vshrl.u32 920167782, %v1622
    %v1635 = vor.u32 %v1633, %v1634
    %v1636 = vshll.u32 920167782, %v1621
    %v1637 = vshrl.u32 1326507024, %v1622
    %v1638 = vor.u32 %v1636, %v1637
    %vm1639 = vcmp.lt.s32.totalorder %v1620, 1
    %vm1640 = vcmp.lt.s32.totalorder %v1620, 2
    %vm1641 = vcmp.lt.s32.totalorder %v1620, 3
    %vm1642 = vcmp.lt.s32.totalorder %v1620, 4
    %v1643 = vsel %vm1639, %v1623, %v1626
    %v1644 = vsel %vm1642, %v1632, 2102212464
    %v1645 = vsel %vm1641, %v1629, %v1644
    %v1646 = vsel %vm1640, %v1643, %v1645
    %v1647 = vsel %vm1639, %v1626, %v1629
    %v1648 = vsel %vm1642, %v1635, 920167782
    %v1649 = vsel %vm1641, %v1632, %v1648
    %v1650 = vsel %vm1640, %v1647, %v1649
    %v1651 = vsel %vm1639, %v1629, %v1632
    %v1652 = vsel %vm1642, %v1638, 1326507024
    %v1653 = vsel %vm1641, %v1635, %v1652
    %v1654 = vsel %vm1640, %v1651, %v1653
    %v1655 = vshll.u32 %v1615, 8
    %v1656 = vmul.u32.u64.compose %v1655, %v1654
    %v1657 = vextract.low.u32 %v1656
    %v1658 = vextract.high.u32 %v1656
    %v1659 = vmul.u32.u64.compose %v1655, %v1650
    %v1660 = vextract.low.u32 %v1659
    %v1661 = vextract.high.u32 %v1659
    %v1662 = vmul.u32 %v1655, %v1646
    %v1663 = vadd.s32 %v1658, %v1660
    %vm1664 = vc.u32 %v1658, %v1660
    %v1665 = vadd.s32 %v1661, 1
    %v1666 = vsel %vm1664, %v1665, %v1661
    %v1667 = vadd.s32 %v1662, %v1666
    %v1668 = vadd.s32 %v1667, 536870912
    %v1669 = vshrl.u32 %v1668, 30
    %v1670 = vshll.u32 %v1669, 30
    %v1671 = vsub.s32 %v1667, %v1670
    %vm1672 = vcmp.lt.s32.totalorder %v1671, 0
    %v1673 = vsub.s32 0, %v1671
    %v1674 = vsel %vm1672, %v1673, %v1671
    %v1675 = vclz %v1674
    %v1676 = vsub.s32 %v1675, 2
    %vm1677 = vcmp.gt.s32.totalorder 0, %v1676
    %v1678 = vsel %vm1677, 0, %v1676
    %v1679 = vsub.s32 32, %v1678
    %v1680 = vshll.u32 %v1671, %v1678
    %v1681 = vshrl.u32 %v1663, %v1679
    %v1682 = vor.u32 %v1680, %v1681
    %v1683 = vsub.s32 4294967266, %v1678
    %v1684 = vadd.s32 %v1683, 127
    %v1685 = vshll.u32 %v1684, 23
    %v1686 = vor.u32 4788187, %v1685
    %v1687 = vand.u32 2147483647, %v1686
    %v1689 = vcvt.s32.f32 %v1682
    %v1690 = vmul.f32 %v1689, %v1687
    %v1691 = vxor.u32 %v1690, 2147483648
    %v1692 = vsel %vm1609, %v1691, %v1690
    %v1693 = vsub.s32 4, %v1669
    %v1694 = vsel %vm1609, %v1693, %v1669
    %v1695 = vsel %vm1608, %v1292, %v1692
    %v1696 = vsel %vm1608, 0, %v1694
    %v1697 = vcosq.f32.pop %v1695
    %v1698 = vsinq.f32.pop %v1695
    %vm1699 = vweird.f32 %v1292
    %v1700 = vand.u32 %v1696, 3
    %vm1701 = vcmp.lt.s32.totalorder %v1700, 2
    %vm1702 = vcmp.eq.s32.totalorder %v1700, 0
    %v1703 = vxor.u32 %v1698, 2147483648
    %v1704 = vsel %vm1702, %v1697, %v1703
    %vm1705 = vcmp.eq.s32.totalorder %v1700, 2
    %v1706 = vxor.u32 %v1697, 2147483648
    %v1707 = vsel %vm1705, %v1706, %v1698
    %v1708 = vsel %vm1701, %v1704, %v1707
    %v1709 = vsel %vm1699, nan, %v1708
    %s1710 = scalar_lea.vmem [#allocation5], 128
    %1711 = vst [vmem:[%s1710] sm:$0xff] %v1606
    %1712 = vst [vmem:[%s1710 + $0x8] sm:$0xff] %v1709
    // Predicated region
    $region10: #{tpu_custom_call.1} parent=1 // pred_check
      _
    $region11: #{tpu_custom_call.1} parent=1 // pred_check_branch
      %1714 = sbr.rel (0) target = $region13
    $region12: #{tpu_custom_call.1} parent=1 // pred_region
      %s1716 = ssub.s32 2304, 2304
      %1717 = vsyncadd [#allocation4], %s1716
      %s1718 = sshll.u32 [#allocation5], 4
      %s1719 = int_to_ptr.vmem [resolvable:$true] %s1718
      %1724 = dma.vmem_to_hbm [thread:$0]  %s1719, 2304, %s1, [#allocation4], 128, 128, 8
    $region13: #{tpu_custom_call.1} parent=1 // pred_fallthru
      _
    // Predicated region
    $region14: #{tpu_custom_call.1} parent=1 // pred_check
      _
    $region15: #{tpu_custom_call.1} parent=1 // pred_check_branch
      %1726 = sbr.rel (0) target = $region17
    $region16: #{tpu_custom_call.1} parent=1 // pred_region
      %1727 = dma.done [#allocation4], 2304
    $region17: #{tpu_custom_call.1} parent=1 // pred_fallthru
      _
    %1728 = vsyncpa [#allocation3], 1
    %1729 = vsyncpa [#allocation4], 1

</llo_original>
